<compile_context>
chip_gen: v7x
topology: tpu7x:2x2x1
jax: 0.10.0
libtpu: 0.0.40
codegen_flags: <defaults>
</compile_context>

<pallas_src>
import jax
import jax.numpy as jnp
import numpy as np
from jax import lax
from jax.experimental import pallas as pl
from jax.experimental.pallas import tpu as pltpu

# ---------------- config (small, consistent with QWenModel.__init__) ------------
HIDDEN = 32                      # config.hidden_size
NUM_HEADS = 4                    # config.num_attention_heads
HEAD_DIM = HIDDEN // NUM_HEADS   # 8
INTERMEDIATE = 64                # config.intermediate_size // 2
NUM_LAYERS = 2                   # config.num_hidden_layers
VOCAB = 150                      # config.vocab_size
VOCAB_PAD = (VOCAB + 63) // 64 * 64
SEQ = 8                          # flattened tokens (no batch dim)
EPS = 1e-6                       # config.layer_norm_epsilon
ROPE_THETA = 10000.0
SCALE = HEAD_DIM ** -0.5

# packed small-per-layer block: [ln1 (H) | ln2 (H) | b_qkv (3H)]
SMALL_W = 5 * HIDDEN             # 160

# packed shared-constants block row offsets (all rows are 32 lanes wide, f32)
C_COS = 0                        # (SEQ, H) rope cos, per-head tiled
C_SIN = C_COS + SEQ              # (SEQ, H) rope sin
C_LNF = C_SIN + SEQ              # (1, H)  ln_f weight (+7 zero pad rows)
C_ROT = C_LNF + 8                # (H, H)  +-1 rotate-half permutation
C_HSEL = C_ROT + HIDDEN          # (NUM_HEADS*SEQ, H) head-select 0/1
C_CAUS = C_HSEL + NUM_HEADS * SEQ  # (SEQ, NUM_HEADS*SEQ) causal 0/1
CONST_ROWS = C_CAUS + SEQ        # 96


# ---------------- fused kernel ----------------------------------------------------
def qwen_stack_kernel(ids_ref, wte_ref, consts_ref, small_ref,
                      wqkv_ref, wo_ref, wgu_ref, wdn_ref, out_ref):
    layer = pl.program_id(0)

    # --- layer 0: fused VocabParallelEmbedding gather into the residual (out_ref)
    @pl.when(layer == 0)
    def _():
        for t in range(SEQ):                                  # SEQ tiny -> unrolled
            out_ref[t:t + 1, :] = wte_ref[pl.ds(ids_ref[t], 1), :]

    # --- shared constants (single packed block, static sublane slices) -----------
    cos = consts_ref[C_COS:C_COS + SEQ, :]                    # (T, H)
    sin = consts_ref[C_SIN:C_SIN + SEQ, :]                    # (T, H)
    lnf = consts_ref[C_LNF:C_LNF + 1, :]                      # (1, H)
    rot = consts_ref[C_ROT:C_ROT + HIDDEN, :].astype(jnp.bfloat16)     # (H, H) +-1
    hsel = consts_ref[C_HSEL:C_HSEL + NUM_HEADS * SEQ, :]     # (NH*T, H) 0/1
    ccat = consts_ref[C_CAUS:C_CAUS + SEQ, :]                 # (T, NH*T) 0/1

    # --- per-layer small params (single packed block) -----------------------------
    ln1 = small_ref[:, 0:HIDDEN]                              # (1, H)
    ln2 = small_ref[:, HIDDEN:2 * HIDDEN]                     # (1, H)
    bqkv = small_ref[:, 2 * HIDDEN:]                          # (1, 3H)

    def rmsnorm(x, w):
        var = jnp.mean(x * x, axis=-1, keepdims=True)
        return x * lax.rsqrt(var + EPS) * w

    def rope(x):        # packed-layout neox rotary; +-1 rot matrix is bf16-exact
        xr = jnp.dot(x.astype(jnp.bfloat16), rot,
                     preferred_element_type=jnp.float32)
        return x * cos + xr * sin

    h = out_ref[...]                                          # residual (T, H) f32

    # ------------------------------ attention block -------------------------------
    x = rmsnorm(h, ln1)
    qkv = jnp.dot(x.astype(jnp.bfloat16), wqkv_ref[...],
                  preferred_element_type=jnp.float32) + bqkv  # (T, 3H)
    q = rope(qkv[:, :HIDDEN]) * SCALE                         # scale folded once
    k = rope(qkv[:, HIDDEN:2 * HIDDEN])
    v = qkv[:, 2 * HIDDEN:]

    # Block-diagonal attention: heads stacked along sublanes of one (NH*T, H)
    # K/V expansion -> one score dot, one PV dot, one denominator dot (no
    # per-head micro-dots, no lane concatenate).  Kept f32 on purpose at toy
    # size; at real sizes this becomes a bf16 flash-style K-tile loop.
    kstk = jnp.concatenate([k] * NUM_HEADS, axis=0) * hsel    # (NH*T, H)
    vstk = jnp.concatenate([v] * NUM_HEADS, axis=0) * hsel    # (NH*T, H)
    s = lax.dot_general(q, kstk, (((1,), (1,)), ((), ())),
                        preferred_element_type=jnp.float32)   # (T, NH*T)
    s = jnp.where(ccat > 0.0, s, -1e30)
    m = jnp.max(s, axis=-1, keepdims=True)   # global row max: per-head softmax invariant
    p = jnp.exp(s - m)
    o_un = jnp.dot(p, vstk, preferred_element_type=jnp.float32)   # (T, H) unnormalized
    dbc = jnp.dot(p, hsel, preferred_element_type=jnp.float32)    # (T, H) per-head denom
    attn = o_un * pl.reciprocal(dbc, approx=True)                 # EUP slot

    h = h + jnp.dot(attn.astype(jnp.bfloat16), wo_ref[...],
                    preferred_element_type=jnp.float32)

    # -------------------------------- MLP block -----------------------------------
    x = rmsnorm(h, ln2)
    gu = jnp.dot(x.astype(jnp.bfloat16), wgu_ref[...],
                 preferred_element_type=jnp.float32)          # (T, 2I) = 128 lanes
    g = gu[:, :INTERMEDIATE]
    u = gu[:, INTERMEDIATE:]
    a = g * jax.nn.sigmoid(g) * u                             # SiluAndMul (f32)
    h = h + jnp.dot(a.astype(jnp.bfloat16), wdn_ref[...],
                    preferred_element_type=jnp.float32)

    # One store per layer; out_ref doubles as the residual accumulator.
    is_last = layer == NUM_LAYERS - 1

    @pl.when(jnp.logical_not(is_last))
    def _():
        out_ref[...] = h

    @pl.when(is_last)
    def _():
        out_ref[...] = rmsnorm(h, lnf)                        # final ln_f


def qwen_pallas(input_ids, wte, consts, small, w_qkv, w_o, w_gu, w_dn):
    per_layer = lambda l, ids: (l, 0, 0)      # index_maps get the prefetch ref too
    shared = lambda l, ids: (0, 0)
    grid_spec = pltpu.PrefetchScalarGridSpec(
        num_scalar_prefetch=1,                # input_ids -> SMEM, read in-kernel
        grid=(NUM_LAYERS,),
        in_specs=[
            pl.BlockSpec((VOCAB_PAD, HIDDEN), shared),                   # wte
            pl.BlockSpec((CONST_ROWS, HIDDEN), shared),                  # packed consts
            pl.BlockSpec((None, 1, SMALL_W), per_layer),                 # ln1|ln2|b_qkv
            pl.BlockSpec((None, HIDDEN, 3 * HIDDEN), per_layer),         # w_qkv
            pl.BlockSpec((None, HIDDEN, HIDDEN), per_layer),             # w_o
            pl.BlockSpec((None, HIDDEN, 2 * INTERMEDIATE), per_layer),   # w_gate_up
            pl.BlockSpec((None, INTERMEDIATE, HIDDEN), per_layer),       # w_down
        ],
        out_specs=pl.BlockSpec((SEQ, HIDDEN), shared),
    )
    return pl.pallas_call(
        qwen_stack_kernel,
        grid_spec=grid_spec,
        out_shape=jax.ShapeDtypeStruct((SEQ, HIDDEN), jnp.float32),
        compiler_params=pltpu.CompilerParams(
            dimension_semantics=("arbitrary",),       # layer axis is sequential
            vmem_limit_bytes=32 * 1024 * 1024),       # explicit budget (v7x-safe)
    )(input_ids, wte, consts, small, w_qkv, w_o, w_gu, w_dn)


# ---------------- host-side constant builders -------------------------------------
def rope_tables_packed(positions):
    """cos/sin tables tiled to the packed (T, H) head-on-lane layout."""
    inv_freq = 1.0 / (ROPE_THETA ** (
        jnp.arange(0, HEAD_DIM, 2, dtype=jnp.float32) / HEAD_DIM))
    ang = positions.astype(jnp.float32)[:, None] * inv_freq[None, :]   # (T, hd/2)
    cos = jnp.concatenate([jnp.cos(ang), jnp.cos(ang)], axis=-1)       # (T, hd)
    sin = jnp.concatenate([jnp.sin(ang), jnp.sin(ang)], axis=-1)
    return jnp.tile(cos, (1, NUM_HEADS)), jnp.tile(sin, (1, NUM_HEADS))  # (T, H)


def rotate_half_matrix():
    """(H, H) +-1 permutation: (x @ R) == neox rotate_half(x) per packed head."""
    r = np.zeros((HIDDEN, HIDDEN), np.float32)
    half = HEAD_DIM // 2
    for h in range(NUM_HEADS):
        base = h * HEAD_DIM
        for j in range(half):
            r[base + half + j, base + j] = -1.0   # first half of out  <- -x2
            r[base + j, base + half + j] = 1.0    # second half of out <-  x1
    return jnp.asarray(r)


def head_select_matrix():
    """(NH*T, H) 0/1: hsel[h*T+s, d] = 1 iff hidden dim d belongs to head h."""
    m = np.zeros((NUM_HEADS * SEQ, HIDDEN), np.float32)
    for h in range(NUM_HEADS):
        m[h * SEQ:(h + 1) * SEQ, h * HEAD_DIM:(h + 1) * HEAD_DIM] = 1.0
    return jnp.asarray(m)


def causal_cat_mask():
    """(T, NH*T) 0/1: ccat[t, h*T+s] = 1 iff s <= t (same causal mask per head)."""
    m = np.zeros((SEQ, NUM_HEADS * SEQ), np.float32)
    for t in range(SEQ):
        for h in range(NUM_HEADS):
            m[t, h * SEQ:h * SEQ + t + 1] = 1.0
    return jnp.asarray(m)


def init_params(key):
    def normal(k, shape, scale=0.02):
        return scale * jax.random.normal(k, shape, jnp.float32)

    keys = jax.random.split(key, 8)
    return {
        "wte": normal(keys[0], (VOCAB_PAD, HIDDEN)),
        "ln1": jnp.ones((NUM_LAYERS, 1, HIDDEN), jnp.float32),
        "ln2": jnp.ones((NUM_LAYERS, 1, HIDDEN), jnp.float32),
        "ln_f": jnp.ones((1, HIDDEN), jnp.float32),
        "w_qkv": normal(keys[1], (NUM_LAYERS, HIDDEN, 3 * HIDDEN)).astype(jnp.bfloat16),
        "b_qkv": normal(keys[2], (NUM_LAYERS, 1, 3 * HIDDEN)),
        "w_o": normal(keys[3], (NUM_LAYERS, HIDDEN, HIDDEN)).astype(jnp.bfloat16),
        "w_gate_up": normal(keys[4], (NUM_LAYERS, HIDDEN, 2 * INTERMEDIATE)).astype(jnp.bfloat16),
        "w_down": normal(keys[5], (NUM_LAYERS, INTERMEDIATE, HIDDEN)).astype(jnp.bfloat16),
    }


@jax.jit
def qwen_forward(params, input_ids, positions):
    cos, sin = rope_tables_packed(positions)
    lnf_pad = jnp.concatenate(
        [params["ln_f"], jnp.zeros((7, HIDDEN), jnp.float32)], axis=0)   # (8, H)
    consts = jnp.concatenate(
        [cos, sin, lnf_pad, rotate_half_matrix(),
         head_select_matrix(), causal_cat_mask()], axis=0)               # (96, H)
    small = jnp.concatenate(
        [params["ln1"], params["ln2"], params["b_qkv"]], axis=-1)        # (L, 1, 160)
    return qwen_pallas(input_ids, params["wte"], consts, small,
                       params["w_qkv"], params["w_o"],
                       params["w_gate_up"], params["w_down"])


# ---------------- pure-JAX reference (f32, classic rope) --------------------------
def ref_forward(params, input_ids, positions):
    t = input_ids.shape[0]
    inv_freq = 1.0 / (ROPE_THETA ** (
        jnp.arange(0, HEAD_DIM, 2, dtype=jnp.float32) / HEAD_DIM))
    ang = positions.astype(jnp.float32)[:, None] * inv_freq[None, :]
    cos, sin = jnp.cos(ang), jnp.sin(ang)
    f32 = lambda a: a.astype(jnp.float32)

    def rms(x, w):
        return x * lax.rsqrt(jnp.mean(x * x, -1, keepdims=True) + EPS) * w

    def rope(x):                 # x: (nh, T, hd)
        x1, x2 = x[..., :HEAD_DIM // 2], x[..., HEAD_DIM // 2:]
        return jnp.concatenate([x1 * cos - x2 * sin, x2 * cos + x1 * sin], -1)

    h = f32(params["wte"])[input_ids]
    for i in range(NUM_LAYERS):
        resid = h
        x = rms(h, params["ln1"][i, 0])
        qkv = x @ f32(params["w_qkv"][i]) + params["b_qkv"][i, 0]
        q, k, v = jnp.split(qkv, 3, -1)
        q, k, v = (a.reshape(t, NUM_HEADS, HEAD_DIM).transpose(1, 0, 2)
                   for a in (q, k, v))
        q, k = rope(q), rope(k)
        s = jnp.einsum("hqd,hkd->hqk", q, k) * SCALE
        mask = jnp.tril(jnp.ones((t, t), bool))
        s = jnp.where(mask[None], s, -1e30)
        p = jax.nn.softmax(s, -1)
        o = jnp.einsum("hqk,hkd->hqd", p, v).transpose(1, 0, 2).reshape(t, HIDDEN)
        h = resid + o @ f32(params["w_o"][i])
        resid = h
        x = rms(h, params["ln2"][i, 0])
        gu = x @ f32(params["w_gate_up"][i])
        g, u = gu[:, :INTERMEDIATE], gu[:, INTERMEDIATE:]
        h = resid + (jax.nn.silu(g) * u) @ f32(params["w_down"][i])
    return rms(h, params["ln_f"][0])


# ---------------- main -------------------------------------------------------------
if __name__ == "__main__":
    key = jax.random.PRNGKey(0)
    pkey, ikey = jax.random.split(key)
    params = init_params(pkey)
    input_ids = jax.random.randint(ikey, (SEQ,), 0, VOCAB, dtype=jnp.int32)
    positions = jnp.arange(SEQ, dtype=jnp.int32)

    out = jax.block_until_ready(qwen_forward(params, input_ids, positions))
    ref = jax.block_until_ready(ref_forward(params, input_ids, positions))
    # bf16 weights / bf16 rot dot / approx-reciprocal softmax are intentional
    # precision trade-offs; 2e-2 tolerance vs the f32 reference is expected.
    np.testing.assert_allclose(np.asarray(out), np.asarray(ref), rtol=2e-2, atol=2e-2)

    print("KERNEL_OK")
</pallas_src>

<mosaic_0001>
module attributes {stable_mosaic.version = 11 : i64} {
  func.func @qwen_stack_kernel(%arg0: i32, %arg1: memref<8xi32, #tpu.memory_space<smem>>, %arg2: memref<192x32xf32, #tpu.memory_space<vmem>>, %arg3: memref<96x32xf32, #tpu.memory_space<vmem>>, %arg4: memref<1x1x160xf32, #tpu.memory_space<vmem>>, %arg5: memref<1x32x96xbf16, #tpu.memory_space<vmem>>, %arg6: memref<1x32x32xbf16, #tpu.memory_space<vmem>>, %arg7: memref<1x32x128xbf16, #tpu.memory_space<vmem>>, %arg8: memref<1x64x32xbf16, #tpu.memory_space<vmem>>, %arg9: memref<8x32xf32, #tpu.memory_space<vmem>>) attributes {dimension_semantics = [#tpu.dimension_semantics<arbitrary>], iteration_bounds = array<i64: 2>, scalar_prefetch = 1 : i64, scratch_operands = 0 : i64, tpu.core_type = #tpu.core_type<tc>, window_params = [{pipeline_mode = #tpu.pipeline_mode<synchronous>, transform_indices = @transform_0, window_bounds = array<i64: 192, 32>}, {pipeline_mode = #tpu.pipeline_mode<synchronous>, transform_indices = @transform_1, window_bounds = array<i64: 96, 32>}, {transform_indices = @transform_2, window_bounds = array<i64: 1, 1, 160>}, {transform_indices = @transform_3, window_bounds = array<i64: 1, 32, 96>}, {transform_indices = @transform_4, window_bounds = array<i64: 1, 32, 32>}, {transform_indices = @transform_5, window_bounds = array<i64: 1, 32, 128>}, {transform_indices = @transform_6, window_bounds = array<i64: 1, 64, 32>}, {pipeline_mode = #tpu.pipeline_mode<synchronous>, transform_indices = @transform_7, window_bounds = array<i64: 8, 32>}]} {
    %c0_i32 = arith.constant 0 : i32
    %0 = arith.cmpi eq, %arg0, %c0_i32 : i32
    %1 = arith.extui %0 : i1 to i32
    %c0_i32_0 = arith.constant 0 : i32
    %2 = arith.cmpi ne, %1, %c0_i32_0 : i32
    scf.if %2 {
      %c0_49 = arith.constant 0 : index
      %109 = memref.load %arg1[%c0_49] : memref<8xi32, #tpu.memory_space<smem>>
      %110 = arith.index_cast %109 : i32 to index
      %c0_50 = arith.constant 0 : index
      %111 = vector.load %arg2[%110, %c0_50] : memref<192x32xf32, #tpu.memory_space<vmem>>, vector<1x32xf32>
      %c0_51 = arith.constant 0 : index
      %c0_52 = arith.constant 0 : index
      %112 = vector.load %arg9[%c0_51, %c0_52] : memref<8x32xf32, #tpu.memory_space<vmem>>, vector<1x32xf32>
      tpu.vector_store %arg9[%c0_51, %c0_52], %111 {strides = array<i32>} : memref<8x32xf32, #tpu.memory_space<vmem>>, vector<1x32xf32>,
      %c1 = arith.constant 1 : index
      %113 = memref.load %arg1[%c1] : memref<8xi32, #tpu.memory_space<smem>>
      %114 = arith.index_cast %113 : i32 to index
      %c0_53 = arith.constant 0 : index
      %115 = vector.load %arg2[%114, %c0_53] : memref<192x32xf32, #tpu.memory_space<vmem>>, vector<1x32xf32>
      %c1_54 = arith.constant 1 : index
      %c0_55 = arith.constant 0 : index
      %116 = vector.load %arg9[%c1_54, %c0_55] : memref<8x32xf32, #tpu.memory_space<vmem>>, vector<1x32xf32>
      tpu.vector_store %arg9[%c1_54, %c0_55], %115 {strides = array<i32>} : memref<8x32xf32, #tpu.memory_space<vmem>>, vector<1x32xf32>,
      %c2 = arith.constant 2 : index
      %117 = memref.load %arg1[%c2] : memref<8xi32, #tpu.memory_space<smem>>
      %118 = arith.index_cast %117 : i32 to index
      %c0_56 = arith.constant 0 : index
      %119 = vector.load %arg2[%118, %c0_56] : memref<192x32xf32, #tpu.memory_space<vmem>>, vector<1x32xf32>
      %c2_57 = arith.constant 2 : index
      %c0_58 = arith.constant 0 : index
      %120 = vector.load %arg9[%c2_57, %c0_58] : memref<8x32xf32, #tpu.memory_space<vmem>>, vector<1x32xf32>
      tpu.vector_store %arg9[%c2_57, %c0_58], %119 {strides = array<i32>} : memref<8x32xf32, #tpu.memory_space<vmem>>, vector<1x32xf32>,
      %c3 = arith.constant 3 : index
      %121 = memref.load %arg1[%c3] : memref<8xi32, #tpu.memory_space<smem>>
      %122 = arith.index_cast %121 : i32 to index
      %c0_59 = arith.constant 0 : index
      %123 = vector.load %arg2[%122, %c0_59] : memref<192x32xf32, #tpu.memory_space<vmem>>, vector<1x32xf32>
      %c3_60 = arith.constant 3 : index
      %c0_61 = arith.constant 0 : index
      %124 = vector.load %arg9[%c3_60, %c0_61] : memref<8x32xf32, #tpu.memory_space<vmem>>, vector<1x32xf32>
      tpu.vector_store %arg9[%c3_60, %c0_61], %123 {strides = array<i32>} : memref<8x32xf32, #tpu.memory_space<vmem>>, vector<1x32xf32>,
      %c4 = arith.constant 4 : index
      %125 = memref.load %arg1[%c4] : memref<8xi32, #tpu.memory_space<smem>>
      %126 = arith.index_cast %125 : i32 to index
      %c0_62 = arith.constant 0 : index
      %127 = vector.load %arg2[%126, %c0_62] : memref<192x32xf32, #tpu.memory_space<vmem>>, vector<1x32xf32>
      %c4_63 = arith.constant 4 : index
      %c0_64 = arith.constant 0 : index
      %128 = vector.load %arg9[%c4_63, %c0_64] : memref<8x32xf32, #tpu.memory_space<vmem>>, vector<1x32xf32>
      tpu.vector_store %arg9[%c4_63, %c0_64], %127 {strides = array<i32>} : memref<8x32xf32, #tpu.memory_space<vmem>>, vector<1x32xf32>,
      %c5 = arith.constant 5 : index
      %129 = memref.load %arg1[%c5] : memref<8xi32, #tpu.memory_space<smem>>
      %130 = arith.index_cast %129 : i32 to index
      %c0_65 = arith.constant 0 : index
      %131 = vector.load %arg2[%130, %c0_65] : memref<192x32xf32, #tpu.memory_space<vmem>>, vector<1x32xf32>
      %c5_66 = arith.constant 5 : index
      %c0_67 = arith.constant 0 : index
      %132 = vector.load %arg9[%c5_66, %c0_67] : memref<8x32xf32, #tpu.memory_space<vmem>>, vector<1x32xf32>
      tpu.vector_store %arg9[%c5_66, %c0_67], %131 {strides = array<i32>} : memref<8x32xf32, #tpu.memory_space<vmem>>, vector<1x32xf32>,
      %c6 = arith.constant 6 : index
      %133 = memref.load %arg1[%c6] : memref<8xi32, #tpu.memory_space<smem>>
      %134 = arith.index_cast %133 : i32 to index
      %c0_68 = arith.constant 0 : index
      %135 = vector.load %arg2[%134, %c0_68] : memref<192x32xf32, #tpu.memory_space<vmem>>, vector<1x32xf32>
      %c6_69 = arith.constant 6 : index
      %c0_70 = arith.constant 0 : index
      %136 = vector.load %arg9[%c6_69, %c0_70] : memref<8x32xf32, #tpu.memory_space<vmem>>, vector<1x32xf32>
      tpu.vector_store %arg9[%c6_69, %c0_70], %135 {strides = array<i32>} : memref<8x32xf32, #tpu.memory_space<vmem>>, vector<1x32xf32>,
      %c7 = arith.constant 7 : index
      %137 = memref.load %arg1[%c7] : memref<8xi32, #tpu.memory_space<smem>>
      %138 = arith.index_cast %137 : i32 to index
      %c0_71 = arith.constant 0 : index
      %139 = vector.load %arg2[%138, %c0_71] : memref<192x32xf32, #tpu.memory_space<vmem>>, vector<1x32xf32>
      %c7_72 = arith.constant 7 : index
      %c0_73 = arith.constant 0 : index
      %140 = vector.load %arg9[%c7_72, %c0_73] : memref<8x32xf32, #tpu.memory_space<vmem>>, vector<1x32xf32>
      tpu.vector_store %arg9[%c7_72, %c0_73], %139 {strides = array<i32>} : memref<8x32xf32, #tpu.memory_space<vmem>>, vector<1x32xf32>,
    } else {
    }
    %c0 = arith.constant 0 : index
    %c0_1 = arith.constant 0 : index
    %3 = vector.load %arg3[%c0, %c0_1] : memref<96x32xf32, #tpu.memory_space<vmem>>, vector<8x32xf32>
    %c8 = arith.constant 8 : index
    %c0_2 = arith.constant 0 : index
    %4 = vector.load %arg3[%c8, %c0_2] : memref<96x32xf32, #tpu.memory_space<vmem>>, vector<8x32xf32>
    %c16 = arith.constant 16 : index
    %c0_3 = arith.constant 0 : index
    %5 = vector.load %arg3[%c16, %c0_3] : memref<96x32xf32, #tpu.memory_space<vmem>>, vector<1x32xf32>
    %c24 = arith.constant 24 : index
    %c0_4 = arith.constant 0 : index
    %6 = vector.load %arg3[%c24, %c0_4] : memref<96x32xf32, #tpu.memory_space<vmem>>, vector<32x32xf32>
    %7 = arith.truncf %6 : vector<32x32xf32> to vector<32x32xbf16>
    %c56 = arith.constant 56 : index
    %c0_5 = arith.constant 0 : index
    %8 = vector.load %arg3[%c56, %c0_5] : memref<96x32xf32, #tpu.memory_space<vmem>>, vector<32x32xf32>
    %c88 = arith.constant 88 : index
    %c0_6 = arith.constant 0 : index
    %9 = vector.load %arg3[%c88, %c0_6] : memref<96x32xf32, #tpu.memory_space<vmem>>, vector<8x32xf32>
    %c0_7 = arith.constant 0 : index
    %c0_8 = arith.constant 0 : index
    %c0_9 = arith.constant 0 : index
    %10 = vector.load %arg4[%c0_7, %c0_8, %c0_9] : memref<1x1x160xf32, #tpu.memory_space<vmem>>, vector<1x1x32xf32>
    %11 = vector.shape_cast %10 : vector<1x1x32xf32> to vector<1x32xf32>
    %c0_10 = arith.constant 0 : index
    %c0_11 = arith.constant 0 : index
    %c32 = arith.constant 32 : index
    %12 = vector.load %arg4[%c0_10, %c0_11, %c32] : memref<1x1x160xf32, #tpu.memory_space<vmem>>, vector<1x1x32xf32>
    %13 = vector.shape_cast %12 : vector<1x1x32xf32> to vector<1x32xf32>
    %c0_12 = arith.constant 0 : index
    %c0_13 = arith.constant 0 : index
    %c64 = arith.constant 64 : index
    %14 = vector.load %arg4[%c0_12, %c0_13, %c64] : memref<1x1x160xf32, #tpu.memory_space<vmem>>, vector<1x1x96xf32>
    %15 = vector.shape_cast %14 : vector<1x1x96xf32> to vector<1x96xf32>
    %c0_14 = arith.constant 0 : index
    %c0_15 = arith.constant 0 : index
    %16 = vector.load %arg9[%c0_14, %c0_15] : memref<8x32xf32, #tpu.memory_space<vmem>>, vector<8x32xf32>
    %17 = arith.mulf %16, %16 : vector<8x32xf32>
    %cst = arith.constant dense<0.000000e+00> : vector<8xf32>
    %18 = vector.multi_reduction <add>, %17, %cst [1] : vector<8x32xf32> to vector<8xf32>
    %19 = vector.shape_cast %18 : vector<8xf32> to vector<8x1xf32>
    %cst_16 = arith.constant 3.200000e+01 : f32
    %20 = vector.broadcast %cst_16 : f32 to vector<8x1xf32>
    %21 = arith.divf %19, %20 : vector<8x1xf32>
    %cst_17 = arith.constant 9.99999997E-7 : f32
    %22 = vector.broadcast %cst_17 : f32 to vector<8x1xf32>
    %23 = arith.addf %21, %22 : vector<8x1xf32>
    %24 = math.rsqrt %23 : vector<8x1xf32>
    %25 = vector.broadcast %24 : vector<8x1xf32> to vector<8x32xf32>
    %26 = arith.mulf %16, %25 : vector<8x32xf32>
    %27 = vector.broadcast %11 : vector<1x32xf32> to vector<8x32xf32>
    %28 = arith.mulf %26, %27 : vector<8x32xf32>
    %29 = arith.truncf %28 : vector<8x32xf32> to vector<8x32xbf16>
    %c0_18 = arith.constant 0 : index
    %c0_19 = arith.constant 0 : index
    %c0_20 = arith.constant 0 : index
    %30 = vector.load %arg5[%c0_18, %c0_19, %c0_20] : memref<1x32x96xbf16, #tpu.memory_space<vmem>>, vector<1x32x96xbf16>
    %31 = vector.shape_cast %30 : vector<1x32x96xbf16> to vector<32x96xbf16>
    %cst_21 = arith.constant dense<0.000000e+00> : vector<8x96xf32>
    %32 = tpu.matmul %29, %31, %cst_21 {dimension_numbers = #tpu.dot_dimension_numbers<[1], [0], [0], [1], [0, 0, 1, 1], [], []>} : vector<8x32xbf16>, vector<32x96xbf16>, vector<8x96xf32> -> vector<8x96xf32>
    %33 = vector.broadcast %15 : vector<1x96xf32> to vector<8x96xf32>
    %34 = arith.addf %32, %33 : vector<8x96xf32>
    %35 = vector.extract_strided_slice %34 {offsets = [0, 0], sizes = [8, 32], strides = [1, 1]} : vector<8x96xf32> to vector<8x32xf32>
    %36 = arith.truncf %35 : vector<8x32xf32> to vector<8x32xbf16>
    %cst_22 = arith.constant dense<0.000000e+00> : vector<8x32xf32>
    %37 = tpu.matmul %36, %7, %cst_22 {dimension_numbers = #tpu.dot_dimension_numbers<[1], [0], [0], [1], [0, 0, 1, 1], [], []>} : vector<8x32xbf16>, vector<32x32xbf16>, vector<8x32xf32> -> vector<8x32xf32>
    %38 = arith.mulf %35, %3 : vector<8x32xf32>
    %39 = arith.mulf %37, %4 : vector<8x32xf32>
    %40 = arith.addf %38, %39 : vector<8x32xf32>
    %cst_23 = arith.constant 0.353553385 : f32
    %41 = vector.broadcast %cst_23 : f32 to vector<8x32xf32>
    %42 = arith.mulf %40, %41 : vector<8x32xf32>
    %43 = vector.extract_strided_slice %34 {offsets = [0, 32], sizes = [8, 32], strides = [1, 1]} : vector<8x96xf32> to vector<8x32xf32>
    %44 = arith.truncf %43 : vector<8x32xf32> to vector<8x32xbf16>
    %cst_24 = arith.constant dense<0.000000e+00> : vector<8x32xf32>
    %45 = tpu.matmul %44, %7, %cst_24 {dimension_numbers = #tpu.dot_dimension_numbers<[1], [0], [0], [1], [0, 0, 1, 1], [], []>} : vector<8x32xbf16>, vector<32x32xbf16>, vector<8x32xf32> -> vector<8x32xf32>
    %46 = arith.mulf %43, %3 : vector<8x32xf32>
    %47 = arith.mulf %45, %4 : vector<8x32xf32>
    %48 = arith.addf %46, %47 : vector<8x32xf32>
    %49 = vector.extract_strided_slice %34 {offsets = [0, 64], sizes = [8, 32], strides = [1, 1]} : vector<8x96xf32> to vector<8x32xf32>
    %50 = tpu.concatenate %48, %48, %48, %48 in 0 : vector<8x32xf32>, vector<8x32xf32>, vector<8x32xf32>, vector<8x32xf32> -> vector<32x32xf32>
    %51 = arith.mulf %50, %8 : vector<32x32xf32>
    %52 = tpu.concatenate %49, %49, %49, %49 in 0 : vector<8x32xf32>, vector<8x32xf32>, vector<8x32xf32>, vector<8x32xf32> -> vector<32x32xf32>
    %53 = arith.mulf %52, %8 : vector<32x32xf32>
    %cst_25 = arith.constant dense<0.000000e+00> : vector<8x32xf32>
    %54 = tpu.matmul %42, %51, %cst_25 {dimension_numbers = #tpu.dot_dimension_numbers<[1], [1], [0], [0], [0, 0, 1, 0], [], []>} : vector<8x32xf32>, vector<32x32xf32>, vector<8x32xf32> -> vector<8x32xf32>
    %cst_26 = arith.constant 0.000000e+00 : f32
    %55 = vector.broadcast %cst_26 : f32 to vector<8x32xf32>
    %56 = arith.cmpf ogt, %9, %55 : vector<8x32xf32>
    %cst_27 = arith.constant -1.000000e+30 : f32
    %57 = vector.broadcast %cst_27 : f32 to vector<8x32xf32>
    %58 = arith.select %56, %54, %57 : vector<8x32xi1>, vector<8x32xf32>
    %cst_28 = arith.constant dense<0xFF800000> : vector<8xf32>
    %59 = vector.multi_reduction <maximumf>, %58, %cst_28 [1] : vector<8x32xf32> to vector<8xf32>
    %60 = vector.shape_cast %59 : vector<8xf32> to vector<8x1xf32>
    %61 = vector.broadcast %60 : vector<8x1xf32> to vector<8x32xf32>
    %62 = arith.subf %58, %61 : vector<8x32xf32>
    %63 = math.exp %62 : vector<8x32xf32>
    %cst_29 = arith.constant dense<0.000000e+00> : vector<8x32xf32>
    %64 = tpu.matmul %63, %53, %cst_29 {dimension_numbers = #tpu.dot_dimension_numbers<[1], [0], [0], [1], [0, 0, 1, 1], [], []>} : vector<8x32xf32>, vector<32x32xf32>, vector<8x32xf32> -> vector<8x32xf32>
    %cst_30 = arith.constant dense<0.000000e+00> : vector<8x32xf32>
    %65 = tpu.matmul %63, %8, %cst_30 {dimension_numbers = #tpu.dot_dimension_numbers<[1], [0], [0], [1], [0, 0, 1, 1], [], []>} : vector<8x32xf32>, vector<32x32xf32>, vector<8x32xf32> -> vector<8x32xf32>
    %66 = tpu.reciprocal %65 {approx = true} : vector<8x32xf32> -> vector<8x32xf32>
    %67 = arith.mulf %64, %66 : vector<8x32xf32>
    %68 = arith.truncf %67 : vector<8x32xf32> to vector<8x32xbf16>
    %c0_31 = arith.constant 0 : index
    %c0_32 = arith.constant 0 : index
    %c0_33 = arith.constant 0 : index
    %69 = vector.load %arg6[%c0_31, %c0_32, %c0_33] : memref<1x32x32xbf16, #tpu.memory_space<vmem>>, vector<1x32x32xbf16>
    %70 = vector.shape_cast %69 : vector<1x32x32xbf16> to vector<32x32xbf16>
    %cst_34 = arith.constant dense<0.000000e+00> : vector<8x32xf32>
    %71 = tpu.matmul %68, %70, %cst_34 {dimension_numbers = #tpu.dot_dimension_numbers<[1], [0], [0], [1], [0, 0, 1, 1], [], []>} : vector<8x32xbf16>, vector<32x32xbf16>, vector<8x32xf32> -> vector<8x32xf32>
    %72 = arith.addf %16, %71 : vector<8x32xf32>
    %73 = arith.mulf %72, %72 : vector<8x32xf32>
    %cst_35 = arith.constant dense<0.000000e+00> : vector<8xf32>
    %74 = vector.multi_reduction <add>, %73, %cst_35 [1] : vector<8x32xf32> to vector<8xf32>
    %75 = vector.shape_cast %74 : vector<8xf32> to vector<8x1xf32>
    %cst_36 = arith.constant 3.200000e+01 : f32
    %76 = vector.broadcast %cst_36 : f32 to vector<8x1xf32>
    %77 = arith.divf %75, %76 : vector<8x1xf32>
    %cst_37 = arith.constant 9.99999997E-7 : f32
    %78 = vector.broadcast %cst_37 : f32 to vector<8x1xf32>
    %79 = arith.addf %77, %78 : vector<8x1xf32>
    %80 = math.rsqrt %79 : vector<8x1xf32>
    %81 = vector.broadcast %80 : vector<8x1xf32> to vector<8x32xf32>
    %82 = arith.mulf %72, %81 : vector<8x32xf32>
    %83 = vector.broadcast %13 : vector<1x32xf32> to vector<8x32xf32>
    %84 = arith.mulf %82, %83 : vector<8x32xf32>
    %85 = arith.truncf %84 : vector<8x32xf32> to vector<8x32xbf16>
    %c0_38 = arith.constant 0 : index
    %c0_39 = arith.constant 0 : index
    %c0_40 = arith.constant 0 : index
    %86 = vector.load %arg7[%c0_38, %c0_39, %c0_40] : memref<1x32x128xbf16, #tpu.memory_space<vmem>>, vector<1x32x128xbf16>
    %87 = vector.shape_cast %86 : vector<1x32x128xbf16> to vector<32x128xbf16>
    %cst_41 = arith.constant dense<0.000000e+00> : vector<8x128xf32>
    %88 = tpu.matmul %85, %87, %cst_41 {dimension_numbers = #tpu.dot_dimension_numbers<[1], [0], [0], [1], [0, 0, 1, 1], [], []>} : vector<8x32xbf16>, vector<32x128xbf16>, vector<8x128xf32> -> vector<8x128xf32>
    %89 = vector.extract_strided_slice %88 {offsets = [0, 0], sizes = [8, 64], strides = [1, 1]} : vector<8x128xf32> to vector<8x64xf32>
    %90 = vector.extract_strided_slice %88 {offsets = [0, 64], sizes = [8, 64], strides = [1, 1]} : vector<8x128xf32> to vector<8x64xf32>
    %91 = arith.negf %89 : vector<8x64xf32>
    %92 = math.exp %91 : vector<8x64xf32>
    %cst_42 = arith.constant 1.000000e+00 : f32
    %93 = vector.broadcast %cst_42 : f32 to vector<8x64xf32>
    %94 = arith.addf %93, %92 : vector<8x64xf32>
    %95 = arith.divf %93, %94 : vector<8x64xf32>
    %96 = arith.mulf %89, %95 : vector<8x64xf32>
    %97 = arith.mulf %96, %90 : vector<8x64xf32>
    %98 = arith.truncf %97 : vector<8x64xf32> to vector<8x64xbf16>
    %c0_43 = arith.constant 0 : index
    %c0_44 = arith.constant 0 : index
    %c0_45 = arith.constant 0 : index
    %99 = vector.load %arg8[%c0_43, %c0_44, %c0_45] : memref<1x64x32xbf16, #tpu.memory_space<vmem>>, vector<1x64x32xbf16>
    %100 = vector.shape_cast %99 : vector<1x64x32xbf16> to vector<64x32xbf16>
    %cst_46 = arith.constant dense<0.000000e+00> : vector<8x32xf32>
    %101 = tpu.matmul %98, %100, %cst_46 {dimension_numbers = #tpu.dot_dimension_numbers<[1], [0], [0], [1], [0, 0, 1, 1], [], []>} : vector<8x64xbf16>, vector<64x32xbf16>, vector<8x32xf32> -> vector<8x32xf32>
    %102 = arith.addf %72, %101 : vector<8x32xf32>
    %c1_i32 = arith.constant 1 : i32
    %103 = arith.cmpi eq, %arg0, %c1_i32 : i32
    %true = arith.constant true
    %104 = arith.xori %103, %true : i1
    %105 = arith.extui %104 : i1 to i32
    %c0_i32_47 = arith.constant 0 : i32
    %106 = arith.cmpi ne, %105, %c0_i32_47 : i32
    scf.if %106 {
      %c0_49 = arith.constant 0 : index
      %c0_50 = arith.constant 0 : index
      %109 = vector.load %arg9[%c0_49, %c0_50] : memref<8x32xf32, #tpu.memory_space<vmem>>, vector<8x32xf32>
      tpu.vector_store %arg9[%c0_49, %c0_50], %102 {strides = array<i32>} : memref<8x32xf32, #tpu.memory_space<vmem>>, vector<8x32xf32>,
    } else {
    }
    %107 = arith.extui %103 : i1 to i32
    %c0_i32_48 = arith.constant 0 : i32
    %108 = arith.cmpi ne, %107, %c0_i32_48 : i32
    scf.if %108 {
      %109 = arith.mulf %102, %102 : vector<8x32xf32>
      %cst_49 = arith.constant dense<0.000000e+00> : vector<8xf32>
      %110 = vector.multi_reduction <add>, %109, %cst_49 [1] : vector<8x32xf32> to vector<8xf32>
      %111 = vector.shape_cast %110 : vector<8xf32> to vector<8x1xf32>
      %cst_50 = arith.constant 3.200000e+01 : f32
      %112 = vector.broadcast %cst_50 : f32 to vector<8x1xf32>
      %113 = arith.divf %111, %112 : vector<8x1xf32>
      %cst_51 = arith.constant 9.99999997E-7 : f32
      %114 = vector.broadcast %cst_51 : f32 to vector<8x1xf32>
      %115 = arith.addf %113, %114 : vector<8x1xf32>
      %116 = math.rsqrt %115 : vector<8x1xf32>
      %117 = vector.broadcast %116 : vector<8x1xf32> to vector<8x32xf32>
      %118 = arith.mulf %102, %117 : vector<8x32xf32>
      %119 = vector.broadcast %5 : vector<1x32xf32> to vector<8x32xf32>
      %120 = arith.mulf %118, %119 : vector<8x32xf32>
      %c0_52 = arith.constant 0 : index
      %c0_53 = arith.constant 0 : index
      %121 = vector.load %arg9[%c0_52, %c0_53] : memref<8x32xf32, #tpu.memory_space<vmem>>, vector<8x32xf32>
      tpu.vector_store %arg9[%c0_52, %c0_53], %120 {strides = array<i32>} : memref<8x32xf32, #tpu.memory_space<vmem>>, vector<8x32xf32>,
    } else {
    }
    return
  }
  func.func @transform_0(%arg0: i32, %arg1: memref<8xi32, #tpu.memory_space<smem>>) -> (i32, i32) {
    %c0_i32 = arith.constant 0 : i32
    %c0_i32_0 = arith.constant 0 : i32
    %c0_i32_1 = arith.constant 0 : i32
    return %c0_i32, %c0_i32_0 : i32, i32
  }
  func.func @transform_1(%arg0: i32, %arg1: memref<8xi32, #tpu.memory_space<smem>>) -> (i32, i32) {
    %c0_i32 = arith.constant 0 : i32
    %c0_i32_0 = arith.constant 0 : i32
    %c0_i32_1 = arith.constant 0 : i32
    return %c0_i32, %c0_i32_0 : i32, i32
  }
  func.func @transform_2(%arg0: i32, %arg1: memref<8xi32, #tpu.memory_space<smem>>) -> (i32, i32, i32) {
    %c0_i32 = arith.constant 0 : i32
    %c0_i32_0 = arith.constant 0 : i32
    %c0_i32_1 = arith.constant 0 : i32
    return %arg0, %c0_i32, %c0_i32_0 : i32, i32, i32
  }
  func.func @transform_3(%arg0: i32, %arg1: memref<8xi32, #tpu.memory_space<smem>>) -> (i32, i32, i32) {
    %c0_i32 = arith.constant 0 : i32
    %c0_i32_0 = arith.constant 0 : i32
    %c0_i32_1 = arith.constant 0 : i32
    return %arg0, %c0_i32, %c0_i32_0 : i32, i32, i32
  }
  func.func @transform_4(%arg0: i32, %arg1: memref<8xi32, #tpu.memory_space<smem>>) -> (i32, i32, i32) {
    %c0_i32 = arith.constant 0 : i32
    %c0_i32_0 = arith.constant 0 : i32
    %c0_i32_1 = arith.constant 0 : i32
    return %arg0, %c0_i32, %c0_i32_0 : i32, i32, i32
  }
  func.func @transform_5(%arg0: i32, %arg1: memref<8xi32, #tpu.memory_space<smem>>) -> (i32, i32, i32) {
    %c0_i32 = arith.constant 0 : i32
    %c0_i32_0 = arith.constant 0 : i32
    %c0_i32_1 = arith.constant 0 : i32
    return %arg0, %c0_i32, %c0_i32_0 : i32, i32, i32
  }
  func.func @transform_6(%arg0: i32, %arg1: memref<8xi32, #tpu.memory_space<smem>>) -> (i32, i32, i32) {
    %c0_i32 = arith.constant 0 : i32
    %c0_i32_0 = arith.constant 0 : i32
    %c0_i32_1 = arith.constant 0 : i32
    return %arg0, %c0_i32, %c0_i32_0 : i32, i32, i32
  }
  func.func @transform_7(%arg0: i32, %arg1: memref<8xi32, #tpu.memory_space<smem>>) -> (i32, i32) {
    %c0_i32 = arith.constant 0 : i32
    %c0_i32_0 = arith.constant 0 : i32
    %c0_i32_1 = arith.constant 0 : i32
    return %c0_i32, %c0_i32_0 : i32, i32
  }
}

</mosaic_0001>

<llo_original>
// kernel: tile.14
$region0: #{tile.14}
  %s0 = inlined_call_operand.vmem [shape: f32[8,4,8], index: 0, kind: input, shape index: {}]
  %s1 = inlined_call_operand.vmem [shape: f32[8,32], index: 1, kind: output, shape index: {}]
  $region1: #{tile.14} parent=0
    #allocation0 [shape = 'u8[32768]{0}', space=vmem, size = 0x8000, scoped, tag = 'scoped mem for input reshape']
    %s3 = sshllo.u32 0, 4
    %s4 = smul.addr 4, 7
    %s5 = scalar_lea.vmem %s0, %s4
    %v6 = vld [vmem:[%s5] sm:%s3]
    %s7 = scalar_lea.vmem [#allocation0], 56
    %8 = vst [vmem:[%s7] sm:%s3] %v6
    %s9 = smul.addr 4, 6
    %s10 = scalar_lea.vmem %s0, %s9
    %v11 = vld [vmem:[%s10] sm:%s3]
    %s12 = scalar_lea.vmem [#allocation0], 48
    %13 = vst [vmem:[%s12] sm:%s3] %v11
    %s14 = smul.addr 4, 5
    %s15 = scalar_lea.vmem %s0, %s14
    %v16 = vld [vmem:[%s15] sm:%s3]
    %s17 = scalar_lea.vmem [#allocation0], 40
    %18 = vst [vmem:[%s17] sm:%s3] %v16
    %s19 = smul.addr 4, 4
    %s20 = scalar_lea.vmem %s0, %s19
    %v21 = vld [vmem:[%s20] sm:%s3]
    %s22 = scalar_lea.vmem [#allocation0], 32
    %23 = vst [vmem:[%s22] sm:%s3] %v21
    %s24 = smul.addr 4, 3
    %s25 = scalar_lea.vmem %s0, %s24
    %v26 = vld [vmem:[%s25] sm:%s3]
    %s27 = scalar_lea.vmem [#allocation0], 24
    %28 = vst [vmem:[%s27] sm:%s3] %v26
    %s29 = smul.addr 4, 2
    %s30 = scalar_lea.vmem %s0, %s29
    %v31 = vld [vmem:[%s30] sm:%s3]
    %s32 = scalar_lea.vmem [#allocation0], 16
    %33 = vst [vmem:[%s32] sm:%s3] %v31
    %s34 = scalar_lea.vmem %s0, 4
    %v35 = vld [vmem:[%s34] sm:%s3]
    %s36 = scalar_lea.vmem [#allocation0], 8
    %37 = vst [vmem:[%s36] sm:%s3] %v35
    %v38 = vld [vmem:[%s0] sm:%s3]
    %39 = vst [vmem:[#allocation0] sm:%s3] %v38
    %v40 = vld [vmem:[#allocation0] ss:$8 sm:$0xf]
    %v41 = vld [vmem:[#allocation0] ss:$8 sm:$0xf0]
    %vm42 = vcmask 1047556
    %v43 = vsel %vm42, %v41, %v40
    %vm44 = vcmask 64512
    %45 = vst.msk [vmem:[%s1] sm:$0xff] %vm44, %v43
    %s46 = scalar_lea.vmem [#allocation0], 3
    %v47 = vld [vmem:[%s46] ss:$8 sm:$0xf]
    %s48 = scalar_lea.vmem [#allocation0], 3
    %v49 = vld [vmem:[%s48] ss:$8 sm:$0xf0]
    %vm50 = vcmask 1047556
    %v51 = vsel %vm50, %v49, %v47
    %52 = vrot.lane.b32.xlu0 %v51, 24
    %v53 = vpop.permute.xlu0 %52
    %vm54 = vcmask 261312
    %55 = vst.msk [vmem:[%s1] sm:$0xff] %vm54, %v53
    %s56 = scalar_lea.vmem [#allocation0], 2
    %v57 = vld [vmem:[%s56] ss:$8 sm:$0xf]
    %s58 = scalar_lea.vmem [#allocation0], 2
    %v59 = vld [vmem:[%s58] ss:$8 sm:$0xf0]
    %vm60 = vcmask 1047556
    %v61 = vsel %vm60, %v59, %v57
    %62 = vrot.lane.b32.xlu0 %v61, 16
    %v63 = vpop.permute.xlu0 %62
    %vm64 = vcmask 195712
    %65 = vst.msk [vmem:[%s1] sm:$0xff] %vm64, %v63
    %s66 = scalar_lea.vmem [#allocation0], 1
    %v67 = vld [vmem:[%s66] ss:$8 sm:$0xf]
    %s68 = scalar_lea.vmem [#allocation0], 1
    %v69 = vld [vmem:[%s68] ss:$8 sm:$0xf0]
    %vm70 = vcmask 1047556
    %v71 = vsel %vm70, %v69, %v67
    %72 = vrot.lane.b32.xlu0 %v71, 8
    %v73 = vpop.permute.xlu0 %72
    %vm74 = vcmask 130112
    %75 = vst.msk [vmem:[%s1] sm:$0xff] %vm74, %v73

// kernel: qwen_forward.1
$region0: #{qwen_forward.1}
  #allocation0 [shape = 'u32[]', space=smem, size = 0x4, offset = 0x4, fixed_abs, tag = 'smem constant byte address 0x4 - core index']
  #allocation1 [shape = 'u32[144,128]{1,0:T(1,128)}', space=vmem, size = 0x12000, scoped, tag = 'internal scratch']
  #allocation2 [shape = 's32[1]{0}', space=sflag, size = 0x4, scoped, tag = 'scoped memory for qwen_forward.1']
  #allocation3 [shape = 'u8[512]{0}', space=smem, size = 0x200, scoped, tag = 'prefetched SMEM operand 0']
  %s0 = inlined_call_operand.vmem [shape: s32[8], index: 0, kind: input, shape index: {}]
  %s1 = inlined_call_operand.vmem [shape: f32[192,32], index: 1, kind: input, shape index: {}]
  %s2 = inlined_call_operand.vmem [shape: f32[96,32], index: 2, kind: input, shape index: {}]
  %s3 = inlined_call_operand.vmem [shape: f32[2,1,160], index: 3, kind: input, shape index: {}]
  %s4 = inlined_call_operand.vmem [shape: bf16[2,32,96], index: 4, kind: input, shape index: {}]
  %s5 = inlined_call_operand.vmem [shape: bf16[2,32,32], index: 5, kind: input, shape index: {}]
  %s6 = inlined_call_operand.vmem [shape: bf16[2,32,128], index: 6, kind: input, shape index: {}]
  %s7 = inlined_call_operand.vmem [shape: bf16[2,64,32], index: 7, kind: input, shape index: {}]
  %s8 = inlined_call_operand.hbm [shape: f32[8,32], index: 8, kind: output, shape index: {}]
  %s9 = sld [smem:[#allocation0]]
  $region73: #{qwen_forward.1} parent=0
    _
  %s11 = ssub.s32 1, %s9
  %s12 = scalar_select 0, %s11, %s9
  %s13 = sshll.u32 %s0, 4
  %s14 = int_to_ptr.vmem [resolvable:$true] %s13
  %16 = dma.vmem_to_smem %s14, 16, [#allocation3], [#allocation2]
  %17 = dma.done [#allocation2], 16
  %18 = sfence
  $region1: #{qwen_forward.1} parent=0
    #allocation4 [shape = 'u8[4096]{0}', space=vmem, size = 0x1000, scoped, tag = 'output window, operand 0, single buffered']
    #allocation5 [shape = 's32[2]{0}', space=sflag, size = 0x8, scoped, tag = 'scoped memory for qwen_forward.1']
    %19 = vsyncpa [#allocation5], 0
    loop: start=0, step=1, limit=4
    $region2: #{qwen_forward.1} parent=1 // loop_pre_header
      _
    $region3: #{qwen_forward.1} parent=1 // loop_header
      %s21 = sphi 0, %s25
      %p22 = scmp.ge.s32.totalorder %s21, 4
      %s29 = sphi 0, %s29
      %s31 = sphi 0, %s29
      %s32 = sphi 0, %s31
      %s46 = sphi 0, %s32
      %s50 = sphi 0, %s50
      %s52 = sphi 0, %s50
      %s53 = sphi 0, %s52
      %s67 = sphi 0, %s53
      %s73 = sphi 0, %s75
      %s76 = sphi 0, %s73
      %s77 = sphi 0, %s76
      %s93 = sphi 0, %s77
      %s99 = sphi 0, %s101
      %s102 = sphi 0, %s99
      %s103 = sphi 0, %s102
      %s119 = sphi 0, %s103
      %s125 = sphi 0, %s127
      %s128 = sphi 0, %s125
      %s129 = sphi 0, %s128
      %s145 = sphi 0, %s129
      %s151 = sphi 0, %s153
      %s154 = sphi 0, %s151
      %s155 = sphi 0, %s154
      %s171 = sphi 0, %s155
      %s177 = sphi 0, %s179
      %s180 = sphi 0, %s177
      %s181 = sphi 0, %s180
      %s197 = sphi 0, %s181
      %s201 = sphi 0, %s201
      %s203 = sphi 0, %s201
      %s204 = sphi 0, %s203
      %s218 = sphi 0, %s204
    $region4: #{qwen_forward.1} parent=1 // loop_header_branch
      %24 = sbr.rel (%p22) target = $region8
    $region5: #{qwen_forward.1} parent=1 // loop_body
      %s26 = ssub.s32 %s21, 1
      %s27 = ssub.s32 %s21, 2
      %s28 = sadd.s32 %s21, 1
      %s30 = sadd.s32 %s29, 1
      %p33 = scmp.eq.s32.totalorder %s21, 1
      %p34 = scmp.ne.s32.totalorder %s29, %s31
      %p35 = scmp.eq.s32.totalorder %s21, 0
      %p36 = por %p34, %p35
      %p37 = scmp.ne.s32.totalorder %s29, %s31
      %p38 = scmp.eq.s32.totalorder %s26, 1
      %p39 = por %p37, %p38
      %p40 = scmp.ne.s32.totalorder %s31, %s32
      %p41 = scmp.eq.s32.totalorder %s26, 0
      %p42 = por %p40, %p41
      %p43 = scmp.ne.s32.totalorder %s31, %s32
      %p44 = scmp.eq.s32.totalorder %s27, 1
      %p45 = por %p43, %p44
      %p47 = scmp.ne.s32.totalorder %s32, %s46
      %p48 = scmp.eq.s32.totalorder %s27, 0
      %p49 = por %p47, %p48
      %s51 = sadd.s32 %s50, 1
      %p54 = scmp.eq.s32.totalorder %s21, 1
      %p55 = scmp.ne.s32.totalorder %s50, %s52
      %p56 = scmp.eq.s32.totalorder %s21, 0
      %p57 = por %p55, %p56
      %p58 = scmp.ne.s32.totalorder %s50, %s52
      %p59 = scmp.eq.s32.totalorder %s26, 1
      %p60 = por %p58, %p59
      %p61 = scmp.ne.s32.totalorder %s52, %s53
      %p62 = scmp.eq.s32.totalorder %s26, 0
      %p63 = por %p61, %p62
      %p64 = scmp.ne.s32.totalorder %s52, %s53
      %p65 = scmp.eq.s32.totalorder %s27, 1
      %p66 = por %p64, %p65
      %p68 = scmp.ne.s32.totalorder %s53, %s67
      %p69 = scmp.eq.s32.totalorder %s27, 0
      %p70 = por %p68, %p69
      %s71 = ssub.s32 %s21, %s28
      %p72 = scmp.eq.s32.totalorder %s71, 0
      %s74 = sadd.s32 %s73, 1
      %s75 = scalar_select %p72, %s73, %s74
      %p78 = pneg %p72
      %p79 = scmp.eq.s32.totalorder %s21, 1
      %p80 = por %p78, %p79
      %p81 = scmp.ne.s32.totalorder %s73, %s76
      %p82 = scmp.eq.s32.totalorder %s21, 0
      %p83 = por %p81, %p82
      %p84 = scmp.ne.s32.totalorder %s73, %s76
      %p85 = scmp.eq.s32.totalorder %s26, 1
      %p86 = por %p84, %p85
      %p87 = scmp.ne.s32.totalorder %s76, %s77
      %p88 = scmp.eq.s32.totalorder %s26, 0
      %p89 = por %p87, %p88
      %p90 = scmp.ne.s32.totalorder %s76, %s77
      %p91 = scmp.eq.s32.totalorder %s27, 1
      %p92 = por %p90, %p91
      %p94 = scmp.ne.s32.totalorder %s77, %s93
      %p95 = scmp.eq.s32.totalorder %s27, 0
      %p96 = por %p94, %p95
      %s97 = ssub.s32 %s21, %s28
      %p98 = scmp.eq.s32.totalorder %s97, 0
      %s100 = sadd.s32 %s99, 1
      %s101 = scalar_select %p98, %s99, %s100
      %p104 = pneg %p98
      %p105 = scmp.eq.s32.totalorder %s21, 1
      %p106 = por %p104, %p105
      %p107 = scmp.ne.s32.totalorder %s99, %s102
      %p108 = scmp.eq.s32.totalorder %s21, 0
      %p109 = por %p107, %p108
      %p110 = scmp.ne.s32.totalorder %s99, %s102
      %p111 = scmp.eq.s32.totalorder %s26, 1
      %p112 = por %p110, %p111
      %p113 = scmp.ne.s32.totalorder %s102, %s103
      %p114 = scmp.eq.s32.totalorder %s26, 0
      %p115 = por %p113, %p114
      %p116 = scmp.ne.s32.totalorder %s102, %s103
      %p117 = scmp.eq.s32.totalorder %s27, 1
      %p118 = por %p116, %p117
      %p120 = scmp.ne.s32.totalorder %s103, %s119
      %p121 = scmp.eq.s32.totalorder %s27, 0
      %p122 = por %p120, %p121
      %s123 = ssub.s32 %s21, %s28
      %p124 = scmp.eq.s32.totalorder %s123, 0
      %s126 = sadd.s32 %s125, 1
      %s127 = scalar_select %p124, %s125, %s126
      %p130 = pneg %p124
      %p131 = scmp.eq.s32.totalorder %s21, 1
      %p132 = por %p130, %p131
      %p133 = scmp.ne.s32.totalorder %s125, %s128
      %p134 = scmp.eq.s32.totalorder %s21, 0
      %p135 = por %p133, %p134
      %p136 = scmp.ne.s32.totalorder %s125, %s128
      %p137 = scmp.eq.s32.totalorder %s26, 1
      %p138 = por %p136, %p137
      %p139 = scmp.ne.s32.totalorder %s128, %s129
      %p140 = scmp.eq.s32.totalorder %s26, 0
      %p141 = por %p139, %p140
      %p142 = scmp.ne.s32.totalorder %s128, %s129
      %p143 = scmp.eq.s32.totalorder %s27, 1
      %p144 = por %p142, %p143
      %p146 = scmp.ne.s32.totalorder %s129, %s145
      %p147 = scmp.eq.s32.totalorder %s27, 0
      %p148 = por %p146, %p147
      %s149 = ssub.s32 %s21, %s28
      %p150 = scmp.eq.s32.totalorder %s149, 0
      %s152 = sadd.s32 %s151, 1
      %s153 = scalar_select %p150, %s151, %s152
      %p156 = pneg %p150
      %p157 = scmp.eq.s32.totalorder %s21, 1
      %p158 = por %p156, %p157
      %p159 = scmp.ne.s32.totalorder %s151, %s154
      %p160 = scmp.eq.s32.totalorder %s21, 0
      %p161 = por %p159, %p160
      %p162 = scmp.ne.s32.totalorder %s151, %s154
      %p163 = scmp.eq.s32.totalorder %s26, 1
      %p164 = por %p162, %p163
      %p165 = scmp.ne.s32.totalorder %s154, %s155
      %p166 = scmp.eq.s32.totalorder %s26, 0
      %p167 = por %p165, %p166
      %p168 = scmp.ne.s32.totalorder %s154, %s155
      %p169 = scmp.eq.s32.totalorder %s27, 1
      %p170 = por %p168, %p169
      %p172 = scmp.ne.s32.totalorder %s155, %s171
      %p173 = scmp.eq.s32.totalorder %s27, 0
      %p174 = por %p172, %p173
      %s175 = ssub.s32 %s21, %s28
      %p176 = scmp.eq.s32.totalorder %s175, 0
      %s178 = sadd.s32 %s177, 1
      %s179 = scalar_select %p176, %s177, %s178
      %p182 = pneg %p176
      %p183 = scmp.eq.s32.totalorder %s21, 1
      %p184 = por %p182, %p183
      %p185 = scmp.ne.s32.totalorder %s177, %s180
      %p186 = scmp.eq.s32.totalorder %s21, 0
      %p187 = por %p185, %p186
      %p188 = scmp.ne.s32.totalorder %s177, %s180
      %p189 = scmp.eq.s32.totalorder %s26, 1
      %p190 = por %p188, %p189
      %p191 = scmp.ne.s32.totalorder %s180, %s181
      %p192 = scmp.eq.s32.totalorder %s26, 0
      %p193 = por %p191, %p192
      %p194 = scmp.ne.s32.totalorder %s180, %s181
      %p195 = scmp.eq.s32.totalorder %s27, 1
      %p196 = por %p194, %p195
      %p198 = scmp.ne.s32.totalorder %s181, %s197
      %p199 = scmp.eq.s32.totalorder %s27, 0
      %p200 = por %p198, %p199
      %s202 = sadd.s32 %s201, 1
      %p205 = scmp.eq.s32.totalorder %s21, 1
      %p206 = scmp.ne.s32.totalorder %s201, %s203
      %p207 = scmp.eq.s32.totalorder %s21, 0
      %p208 = por %p206, %p207
      %p209 = scmp.ne.s32.totalorder %s201, %s203
      %p210 = scmp.eq.s32.totalorder %s26, 1
      %p211 = por %p209, %p210
      %p212 = scmp.ne.s32.totalorder %s203, %s204
      %p213 = scmp.eq.s32.totalorder %s26, 0
      %p214 = por %p212, %p213
      %p215 = scmp.ne.s32.totalorder %s203, %s204
      %p216 = scmp.eq.s32.totalorder %s27, 1
      %p217 = por %p215, %p216
      %p219 = scmp.ne.s32.totalorder %s204, %s218
      %p220 = scmp.eq.s32.totalorder %s27, 0
      %p221 = por %p219, %p220
      %p222 = scmp.le.s32.totalorder 1, %s21
      %p223 = scmp.lt.s32.totalorder %s21, 3
      %p224 = pnand %p222, %p223
      %p225 = pneg %p224
      // Predicated region
      $region9: #{qwen_forward.1} parent=5 // pred_check
        _
      $region10: #{qwen_forward.1} parent=5 // pred_check_branch
        %227 = sbr.rel (%p224) target = $region12
      $region11: #{qwen_forward.1} parent=5 // pred_region
        %s228 = ssub.s32 %s21, 1
        // Predicated region
        $region13: #{qwen_forward.1} parent=11 // pred_check
          %p229 = pneg %p42
        $region14: #{qwen_forward.1} parent=11 // pred_check_branch
          %231 = sbr.rel (%p229) target = $region16
        $region15: #{qwen_forward.1} parent=11 // pred_region
          _
        $region16: #{qwen_forward.1} parent=11 // pred_fallthru
          _
        // Predicated region
        $region17: #{qwen_forward.1} parent=11 // pred_check
          %p232 = pneg %p63
        $region18: #{qwen_forward.1} parent=11 // pred_check_branch
          %234 = sbr.rel (%p232) target = $region20
        $region19: #{qwen_forward.1} parent=11 // pred_region
          _
        $region20: #{qwen_forward.1} parent=11 // pred_fallthru
          _
      $region12: #{qwen_forward.1} parent=5 // pred_fallthru
        _
      %p235 = scmp.lt.s32.totalorder %s21, 2
      // Predicated region
      $region21: #{qwen_forward.1} parent=5 // pred_check
        %p236 = pneg %p235
      $region22: #{qwen_forward.1} parent=5 // pred_check_branch
        %238 = sbr.rel (%p236) target = $region24
      $region23: #{qwen_forward.1} parent=5 // pred_region
        // Predicated region
        $region25: #{qwen_forward.1} parent=23 // pred_check
          %p239 = pneg %p83
        $region26: #{qwen_forward.1} parent=23 // pred_check_branch
          %241 = sbr.rel (%p239) target = $region28
        $region27: #{qwen_forward.1} parent=23 // pred_region
          %p242 = scmp.lt.s32.totalorder %s21, 1
          %s243 = scalar_select %p242, %s21, 1
          %s244 = smul.addr %s243, 2
          %s245 = scalar_lea.vmem %s3, %s244
        $region28: #{qwen_forward.1} parent=23 // pred_fallthru
          _
        // Predicated region
        $region29: #{qwen_forward.1} parent=23 // pred_check
          %p246 = pneg %p109
        $region30: #{qwen_forward.1} parent=23 // pred_check_branch
          %248 = sbr.rel (%p246) target = $region32
        $region31: #{qwen_forward.1} parent=23 // pred_region
          %p249 = scmp.lt.s32.totalorder %s21, 1
          %s250 = scalar_select %p249, %s21, 1
          %s251 = smul.addr %s250, 4
          %s252 = smul.addr %s251, 4
          %s253 = scalar_lea.vmem %s4, %s252
        $region32: #{qwen_forward.1} parent=23 // pred_fallthru
          _
        // Predicated region
        $region33: #{qwen_forward.1} parent=23 // pred_check
          %p254 = pneg %p135
        $region34: #{qwen_forward.1} parent=23 // pred_check_branch
          %256 = sbr.rel (%p254) target = $region36
        $region35: #{qwen_forward.1} parent=23 // pred_region
          %p257 = scmp.lt.s32.totalorder %s21, 1
          %s258 = scalar_select %p257, %s21, 1
          %s259 = smul.addr %s258, 4
          %s260 = smul.addr %s259, 4
          %s261 = scalar_lea.vmem %s5, %s260
        $region36: #{qwen_forward.1} parent=23 // pred_fallthru
          _
        // Predicated region
        $region37: #{qwen_forward.1} parent=23 // pred_check
          %p262 = pneg %p161
        $region38: #{qwen_forward.1} parent=23 // pred_check_branch
          %264 = sbr.rel (%p262) target = $region40
        $region39: #{qwen_forward.1} parent=23 // pred_region
          %p265 = scmp.lt.s32.totalorder %s21, 1
          %s266 = scalar_select %p265, %s21, 1
          %s267 = smul.addr %s266, 4
          %s268 = smul.addr %s267, 4
          %s269 = scalar_lea.vmem %s6, %s268
        $region40: #{qwen_forward.1} parent=23 // pred_fallthru
          _
        // Predicated region
        $region41: #{qwen_forward.1} parent=23 // pred_check
          %p270 = pneg %p187
        $region42: #{qwen_forward.1} parent=23 // pred_check_branch
          %272 = sbr.rel (%p270) target = $region44
        $region43: #{qwen_forward.1} parent=23 // pred_region
          %p273 = scmp.lt.s32.totalorder %s21, 1
          %s274 = scalar_select %p273, %s21, 1
          %s275 = smul.addr %s274, 8
          %s276 = smul.addr %s275, 4
          %s277 = scalar_lea.vmem %s7, %s276
        $region44: #{qwen_forward.1} parent=23 // pred_fallthru
          _
      $region24: #{qwen_forward.1} parent=5 // pred_fallthru
        _
      %p278 = scmp.le.s32.totalorder 1, %s21
      %p279 = scmp.lt.s32.totalorder %s21, 3
      %p280 = pnand %p278, %p279
      %p281 = pneg %p280
      // Predicated region
      $region45: #{qwen_forward.1} parent=5 // pred_check
        _
      $region46: #{qwen_forward.1} parent=5 // pred_check_branch
        %283 = sbr.rel (%p280) target = $region48
      $region47: #{qwen_forward.1} parent=5 // pred_region
        %s284 = ssub.s32 %s21, 1
        %p285 = pneg %p42
        %p286 = pneg %p39
        %p287 = pneg %p63
        %p288 = pneg %p60
        %p289 = scmp.lt.s32.totalorder %s26, 1
        %s290 = scalar_select %p289, %s26, 1
        %s291 = smul.addr %s290, 2
        %s292 = scalar_lea.vmem %s3, %s291
        %p293 = pneg %p89
        %p294 = pneg %p86
        %p295 = scmp.lt.s32.totalorder %s26, 1
        %s296 = scalar_select %p295, %s26, 1
        %s297 = smul.addr %s296, 4
        %s298 = smul.addr %s297, 4
        %s299 = scalar_lea.vmem %s4, %s298
        %p300 = pneg %p115
        %p301 = pneg %p112
        %p302 = scmp.lt.s32.totalorder %s26, 1
        %s303 = scalar_select %p302, %s26, 1
        %s304 = smul.addr %s303, 4
        %s305 = smul.addr %s304, 4
        %s306 = scalar_lea.vmem %s5, %s305
        %p307 = pneg %p141
        %p308 = pneg %p138
        %p309 = scmp.lt.s32.totalorder %s26, 1
        %s310 = scalar_select %p309, %s26, 1
        %s311 = smul.addr %s310, 4
        %s312 = smul.addr %s311, 4
        %s313 = scalar_lea.vmem %s6, %s312
        %p314 = pneg %p167
        %p315 = pneg %p164
        %p316 = scmp.lt.s32.totalorder %s26, 1
        %s317 = scalar_select %p316, %s26, 1
        %s318 = smul.addr %s317, 8
        %s319 = smul.addr %s318, 4
        %s320 = scalar_lea.vmem %s7, %s319
        %p321 = pneg %p193
        %p322 = pneg %p190
        %p323 = pneg %p214
        %p324 = pneg %p211
        %p325 = scmp.lt.s32.totalorder %s26, 1
        %s326 = scalar_select %p325, %s26, 1
        %s327 = smul.addr %s326, 2
        %s328 = scalar_lea.vmem %s3, %s327
        %p329 = scmp.lt.s32.totalorder %s26, 1
        %s330 = scalar_select %p329, %s26, 1
        %s331 = smul.addr %s330, 4
        %s332 = smul.addr %s331, 4
        %s333 = scalar_lea.vmem %s4, %s332
        %p334 = scmp.lt.s32.totalorder %s26, 1
        %s335 = scalar_select %p334, %s26, 1
        %s336 = smul.addr %s335, 4
        %s337 = smul.addr %s336, 4
        %s338 = scalar_lea.vmem %s5, %s337
        %p339 = scmp.lt.s32.totalorder %s26, 1
        %s340 = scalar_select %p339, %s26, 1
        %s341 = smul.addr %s340, 4
        %s342 = smul.addr %s341, 4
        %s343 = scalar_lea.vmem %s6, %s342
        %p344 = scmp.lt.s32.totalorder %s26, 1
        %s345 = scalar_select %p344, %s26, 1
        %s346 = smul.addr %s345, 8
        %s347 = smul.addr %s346, 4
        %s348 = scalar_lea.vmem %s7, %s347
        %p350 = scmp.eq.s32.totalorder %s26, 0
        // Predicated region
        $region49: #{qwen_forward.1} parent=47 // pred_check
          %p351 = pneg %p350
        $region50: #{qwen_forward.1} parent=47 // pred_check_branch
          %353 = sbr.rel (%p351) target = $region52
        $region51: #{qwen_forward.1} parent=47 // pred_region
          %s354 = sld [smem:[#allocation3]]
          %s355 = scalar_lea.vmem %s1, %s354
          %v356 = vld [vmem:[%s355] sm:$0x1]
          %vm357 = vcmask 253952
          %358 = vst.msk [vmem:[#allocation4] sm:$0x1] %vm357, %v356
          %s359 = sld [smem:[#allocation3 + $0x1]]
          %s360 = scalar_lea.vmem %s1, %s359
          %v361 = vld [vmem:[%s360] sm:$0x1]
          %362 = vst.msk [vmem:[#allocation4 + $0x1] sm:$0x1] %vm357, %v361
          %s363 = sld [smem:[#allocation3 + $0x2]]
          %s364 = scalar_lea.vmem %s1, %s363
          %v365 = vld [vmem:[%s364] sm:$0x1]
          %366 = vst.msk [vmem:[#allocation4 + $0x2] sm:$0x1] %vm357, %v365
          %s367 = sld [smem:[#allocation3 + $0x3]]
          %s368 = scalar_lea.vmem %s1, %s367
          %v369 = vld [vmem:[%s368] sm:$0x1]
          %370 = vst.msk [vmem:[#allocation4 + $0x3] sm:$0x1] %vm357, %v369
          %s371 = sld [smem:[#allocation3 + $0x4]]
          %s372 = scalar_lea.vmem %s1, %s371
          %v373 = vld [vmem:[%s372] sm:$0x1]
          %374 = vst.msk [vmem:[#allocation4 + $0x4] sm:$0x1] %vm357, %v373
          %s375 = sld [smem:[#allocation3 + $0x5]]
          %s376 = scalar_lea.vmem %s1, %s375
          %v377 = vld [vmem:[%s376] sm:$0x1]
          %378 = vst.msk [vmem:[#allocation4 + $0x5] sm:$0x1] %vm357, %v377
          %s379 = sld [smem:[#allocation3 + $0x6]]
          %s380 = scalar_lea.vmem %s1, %s379
          %v381 = vld [vmem:[%s380] sm:$0x1]
          %382 = vst.msk [vmem:[#allocation4 + $0x6] sm:$0x1] %vm357, %v381
          %s383 = sld [smem:[#allocation3 + $0x7]]
          %s384 = scalar_lea.vmem %s1, %s383
          %v385 = vld [vmem:[%s384] sm:$0x1]
          %386 = vst.msk [vmem:[#allocation4 + $0x7] sm:$0x1] %vm357, %v385
        $region52: #{qwen_forward.1} parent=47 // pred_fallthru
          _
        %v387 = vld [vmem:[%s2] sm:$0xff]
        %v388 = vld [vmem:[%s2 + $0x8] sm:$0xff]
        %v389 = vld [vmem:[%s2 + $0x10] sm:$0x1]
        %v390 = vld [vmem:[%s2 + $0x18] sm:$0xff]
        %v391 = vld [vmem:[%s2 + $0x20] sm:$0xff]
        %v392 = vld [vmem:[%s2 + $0x28] sm:$0xff]
        %v393 = vld [vmem:[%s2 + $0x30] sm:$0xff]
        %v394 = vpack.c.bf16 %v391, %v390
        %v395 = vpack.c.bf16 %v393, %v392
        %v396 = vld [vmem:[%s2 + $0x38] sm:$0xff]
        %v397 = vld [vmem:[%s2 + $0x40] sm:$0xff]
        %v398 = vld [vmem:[%s2 + $0x48] sm:$0xff]
        %v399 = vld [vmem:[%s2 + $0x50] sm:$0xff]
        %v400 = vld [vmem:[%s2 + $0x58] sm:$0xff]
        %v401 = vld [vmem:[%s328] sm:$0x1]
        %v402 = vld [vmem:[%s328] sm:$0x3]
        %v403 = vld [vmem:[#allocation4] sm:$0xff]
        %v404 = vmul.f32 %v403, %v403
        %vm405 = vcmask 261120
        %v406 = vsel %vm405, %v404, 0.0
        %407 = vadd.xlane.f32.xlu0 %v406
        %v408 = vpop.xlane.xlu0 %407
        %v409 = vrcp.pop 32.0
        %v410 = vmul.f32 %v408, %v409
        %v411 = vadd.f32 %v410, 1e-06
        %v412 = vrsqrt.pop %v411
        %v413 = vmul.f32 %v403, %v412
        %v415 = vlaneseq
        %v416 = vshrl.u32 %v415, 7
        %v417 = vsub.s32 0, %v416
        %v418 = vrot.slane %v401, %v417
        %v420 = vmul.f32 %v413, %v418
        %v421 = vpack.c.bf16 %v420, %v420
        %v422 = vld [vmem:[%s333] sm:$0xf]
        %v423 = vld [vmem:[%s333 + $0x4] sm:$0xf]
        %v424 = vld [vmem:[%s333 + $0x8] sm:$0xf]
        %v425 = vld [vmem:[%s333 + $0xc] sm:$0xf]
        %v427 = vlaneseq
        %v428 = vshrl.u32 %v427, 7
        %v429 = vsub.s32 0, %v428
        %v430 = vrot.slane %v402, %v429
        %v431 = vlaneseq
        %v432 = vshrl.u32 %v431, 7
        %v433 = vsub.s32 1, %v432
        %v434 = vrot.slane %v402, %v433
        %v439 = vunpack.c.l.b16 %v422
        %v440 = vunpack.c.l.b16 %v423
        %v441 = vunpack.c.l.b16 %v424
        %v442 = vunpack.c.l.b16 %v425
        %v443 = vpack.c.b16 %v440, %v439
        %v444 = vpack.c.b16 %v442, %v441
        %447 = vrot.lane.b32.xlu0 %v430, 64
        %v448 = vpop.permute.xlu0 %447
        %449 = vrot.lane.b32.xlu0 %v434, 64
        %v450 = vpop.permute.xlu0 %449
        %vm451 = vcmask 523264
        %v452 = vsel %vm451, %v448, %v450
        %v455 = vsel %vm405, %v421, 0
        %457 = vmatprep.subr.bf16.mxu0 0
        %458 = vmatpush1.bf16.msra.mxu0 %v443
        %459 = vmatprep.subr.bf16.mxu0 0
        %460 = vmatpush1.bf16.msra.mxu0 %v444
        %461 = vmatprep.subr.bf16.mxu0 0
        %462 = vmatpush1.bf16.msra.mxu0 0
        %463 = vmatprep.subr.bf16.mxu0 0
        %464 = vmatpush1.bf16.msra.mxu0 0
        %465 = vmatprep.subr.bf16.mxu0 0
        %466 = vmatpush1.bf16.msra.mxu0 0
        %467 = vmatprep.subr.bf16.mxu0 0
        %468 = vmatpush1.bf16.msra.mxu0 0
        %469 = vmatprep.subr.bf16.mxu0 0
        %470 = vmatpush1.bf16.msra.mxu0 0
        %471 = vmatprep.subr.bf16.mxu0 0
        %472 = vmatpush1.bf16.msra.mxu0 0
        %473 = vmatprep.subr.bf16.mxu0 0
        %474 = vmatpush1.bf16.msra.mxu0 0
        %475 = vmatprep.subr.bf16.mxu0 0
        %476 = vmatpush1.bf16.msra.mxu0 0
        %477 = vmatprep.subr.bf16.mxu0 0
        %478 = vmatpush1.bf16.msra.mxu0 0
        %479 = vmatprep.subr.bf16.mxu0 0
        %480 = vmatpush1.bf16.msra.mxu0 0
        %481 = vmatprep.subr.bf16.mxu0 0
        %482 = vmatpush1.bf16.msra.mxu0 0
        %483 = vmatprep.subr.bf16.mxu0 0
        %484 = vmatpush1.bf16.msra.mxu0 0
        %485 = vmatprep.subr.bf16.mxu0 0
        %486 = vmatpush1.bf16.msra.mxu0 0
        %487 = vmatprep.subr.bf16.mxu0 0
        %488 = vmatpush1.bf16.msra.mxu0 0
        %489 = vmatprep.mubr.bf16.mxu0 0
        %490 = vmatmul.mubr.bf16.gmra.mrb[0].mxu0 %v455
        %v491 = vpop.f32.mrb[0].mxu0
        %v492 = vadd.f32 %v452, %v491
        %v493 = vpop.f32.mrb[0].mxu0
        %v494 = vpop.f32.mrb[0].mxu0
        %v495 = vpop.f32.mrb[0].mxu0
        %496 = vdwg.mxu0
        %v497 = vpack.c.bf16 %v492, %v492
        %v499 = vsel %vm405, %v497, 0
        %501 = vmatprep.subr.bf16.mxu0 0
        %502 = vmatpush1.bf16.msra.mxu0 %v394
        %503 = vmatprep.subr.bf16.mxu0 0
        %504 = vmatpush1.bf16.msra.mxu0 %v395
        %505 = vmatprep.subr.bf16.mxu0 0
        %506 = vmatpush1.bf16.msra.mxu0 0
        %507 = vmatprep.subr.bf16.mxu0 0
        %508 = vmatpush1.bf16.msra.mxu0 0
        %509 = vmatprep.subr.bf16.mxu0 0
        %510 = vmatpush1.bf16.msra.mxu0 0
        %511 = vmatprep.subr.bf16.mxu0 0
        %512 = vmatpush1.bf16.msra.mxu0 0
        %513 = vmatprep.subr.bf16.mxu0 0
        %514 = vmatpush1.bf16.msra.mxu0 0
        %515 = vmatprep.subr.bf16.mxu0 0
        %516 = vmatpush1.bf16.msra.mxu0 0
        %517 = vmatprep.subr.bf16.mxu0 0
        %518 = vmatpush1.bf16.msra.mxu0 0
        %519 = vmatprep.subr.bf16.mxu0 0
        %520 = vmatpush1.bf16.msra.mxu0 0
        %521 = vmatprep.subr.bf16.mxu0 0
        %522 = vmatpush1.bf16.msra.mxu0 0
        %523 = vmatprep.subr.bf16.mxu0 0
        %524 = vmatpush1.bf16.msra.mxu0 0
        %525 = vmatprep.subr.bf16.mxu0 0
        %526 = vmatpush1.bf16.msra.mxu0 0
        %527 = vmatprep.subr.bf16.mxu0 0
        %528 = vmatpush1.bf16.msra.mxu0 0
        %529 = vmatprep.subr.bf16.mxu0 0
        %530 = vmatpush1.bf16.msra.mxu0 0
        %531 = vmatprep.subr.bf16.mxu0 0
        %532 = vmatpush1.bf16.msra.mxu0 0
        %533 = vmatprep.mubr.bf16.mxu0 0
        %534 = vmatmul.mubr.bf16.gmra.mrb[0].mxu0 %v499
        %v535 = vpop.f32.mrb[0].mxu0
        %v536 = vadd.f32 0.0, %v535
        %v537 = vpop.f32.mrb[0].mxu0
        %v538 = vpop.f32.mrb[0].mxu0
        %v539 = vpop.f32.mrb[0].mxu0
        %540 = vdwg.mxu0
        %v541 = vmul.f32 %v492, %v387
        %v542 = vmul.f32 %v536, %v388
        %v543 = vadd.f32 %v541, %v542
        %v544 = vmul.f32 %v543, 0.35355338
        %546 = vrot.lane.b32.xlu0 %v497, 96
        %v547 = vpop.permute.xlu0 %546
        %v549 = vsel %vm405, %v547, 0
        %551 = vmatprep.subr.bf16.mxu0 0
        %552 = vmatpush1.bf16.msra.mxu0 %v394
        %553 = vmatprep.subr.bf16.mxu0 0
        %554 = vmatpush1.bf16.msra.mxu0 %v395
        %555 = vmatprep.subr.bf16.mxu0 0
        %556 = vmatpush1.bf16.msra.mxu0 0
        %557 = vmatprep.subr.bf16.mxu0 0
        %558 = vmatpush1.bf16.msra.mxu0 0
        %559 = vmatprep.subr.bf16.mxu0 0
        %560 = vmatpush1.bf16.msra.mxu0 0
        %561 = vmatprep.subr.bf16.mxu0 0
        %562 = vmatpush1.bf16.msra.mxu0 0
        %563 = vmatprep.subr.bf16.mxu0 0
        %564 = vmatpush1.bf16.msra.mxu0 0
        %565 = vmatprep.subr.bf16.mxu0 0
        %566 = vmatpush1.bf16.msra.mxu0 0
        %567 = vmatprep.subr.bf16.mxu0 0
        %568 = vmatpush1.bf16.msra.mxu0 0
        %569 = vmatprep.subr.bf16.mxu0 0
        %570 = vmatpush1.bf16.msra.mxu0 0
        %571 = vmatprep.subr.bf16.mxu0 0
        %572 = vmatpush1.bf16.msra.mxu0 0
        %573 = vmatprep.subr.bf16.mxu0 0
        %574 = vmatpush1.bf16.msra.mxu0 0
        %575 = vmatprep.subr.bf16.mxu0 0
        %576 = vmatpush1.bf16.msra.mxu0 0
        %577 = vmatprep.subr.bf16.mxu0 0
        %578 = vmatpush1.bf16.msra.mxu0 0
        %579 = vmatprep.subr.bf16.mxu0 0
        %580 = vmatpush1.bf16.msra.mxu0 0
        %581 = vmatprep.subr.bf16.mxu0 0
        %582 = vmatpush1.bf16.msra.mxu0 0
        %583 = vmatprep.mubr.bf16.mxu0 0
        %584 = vmatmul.mubr.bf16.gmra.mrb[0].mxu0 %v549
        %v585 = vpop.f32.mrb[0].mxu0
        %v586 = vadd.f32 0.0, %v585
        %v587 = vpop.f32.mrb[0].mxu0
        %v588 = vpop.f32.mrb[0].mxu0
        %v589 = vpop.f32.mrb[0].mxu0
        %590 = vdwg.mxu0
        %592 = vrot.lane.b32.xlu0 %v387, 32
        %v593 = vpop.permute.xlu0 %592
        %v595 = vmul.f32 %v492, %v593
        %v596 = vmul.f32 %v586, %v388
        %598 = vrot.lane.b32.xlu0 %v596, 32
        %v599 = vpop.permute.xlu0 %598
        %v601 = vadd.f32 %v595, %v599
        %606 = vrot.lane.b32.xlu0 %v396, 32
        %v607 = vpop.permute.xlu0 %606
        %608 = vrot.lane.b32.xlu0 %v397, 32
        %v609 = vpop.permute.xlu0 %608
        %610 = vrot.lane.b32.xlu0 %v398, 32
        %v611 = vpop.permute.xlu0 %610
        %612 = vrot.lane.b32.xlu0 %v399, 32
        %v613 = vpop.permute.xlu0 %612
        %v618 = vmul.f32 %v601, %v607
        %v619 = vmul.f32 %v601, %v609
        %v620 = vmul.f32 %v601, %v611
        %v621 = vmul.f32 %v601, %v613
        %622 = vrot.lane.b32.xlu0 %v396, 64
        %v623 = vpop.permute.xlu0 %622
        %624 = vrot.lane.b32.xlu0 %v397, 64
        %v625 = vpop.permute.xlu0 %624
        %626 = vrot.lane.b32.xlu0 %v398, 64
        %v627 = vpop.permute.xlu0 %626
        %628 = vrot.lane.b32.xlu0 %v399, 64
        %v629 = vpop.permute.xlu0 %628
        %v634 = vmul.f32 %v492, %v623
        %v635 = vmul.f32 %v492, %v625
        %v636 = vmul.f32 %v492, %v627
        %v637 = vmul.f32 %v492, %v629
        %642 = vrot.lane.b32.xlu0 %v618, 96
        %v643 = vpop.permute.xlu0 %642
        %644 = vrot.lane.b32.xlu0 %v619, 96
        %v645 = vpop.permute.xlu0 %644
        %646 = vrot.lane.b32.xlu0 %v620, 96
        %v647 = vpop.permute.xlu0 %646
        %648 = vrot.lane.b32.xlu0 %v621, 96
        %v649 = vpop.permute.xlu0 %648
        %v651 = vsel %vm405, %v544, 0
        %v653 = vsel %vm405, %v643, 0
        %v655 = vsel %vm405, %v645, 0
        %v657 = vsel %vm405, %v647, 0
        %v659 = vsel %vm405, %v649, 0
        %661 = vmatprep.subr.mxu0 0.0
        %662 = vmatpush1.xpose.msra.mxu0 %v653
        %663 = vmatprep.subr.mxu0 0.0
        %664 = vmatpush1.xpose.msra.mxu0 %v655
        %665 = vmatprep.subr.mxu0 0.0
        %666 = vmatpush1.xpose.msra.mxu0 %v657
        %667 = vmatprep.subr.mxu0 0.0
        %668 = vmatpush1.xpose.msra.mxu0 %v659
        %669 = vmatprep.subr.mxu0 0.0
        %670 = vmatpush1.xpose.msra.mxu0 0.0
        %671 = vmatprep.subr.mxu0 0.0
        %672 = vmatpush1.xpose.msra.mxu0 0.0
        %673 = vmatprep.subr.mxu0 0.0
        %674 = vmatpush1.xpose.msra.mxu0 0.0
        %675 = vmatprep.subr.mxu0 0.0
        %676 = vmatpush1.xpose.msra.mxu0 0.0
        %677 = vmatprep.subr.mxu0 0.0
        %678 = vmatpush1.xpose.msra.mxu0 0.0
        %679 = vmatprep.subr.mxu0 0.0
        %680 = vmatpush1.xpose.msra.mxu0 0.0
        %681 = vmatprep.subr.mxu0 0.0
        %682 = vmatpush1.xpose.msra.mxu0 0.0
        %683 = vmatprep.subr.mxu0 0.0
        %684 = vmatpush1.xpose.msra.mxu0 0.0
        %685 = vmatprep.subr.mxu0 0.0
        %686 = vmatpush1.xpose.msra.mxu0 0.0
        %687 = vmatprep.subr.mxu0 0.0
        %688 = vmatpush1.xpose.msra.mxu0 0.0
        %689 = vmatprep.subr.mxu0 0.0
        %690 = vmatpush1.xpose.msra.mxu0 0.0
        %691 = vmatprep.subr.mxu0 0.0
        %692 = vmatpush1.xpose.msra.mxu0 0.0
        %693 = vmatprep.subr.mxu0 0.0
        %694 = vmatpush1.xpose.msra.mxu0 0.0
        %695 = vmatprep.subr.mxu0 0.0
        %696 = vmatpush1.xpose.msra.mxu0 0.0
        %697 = vmatprep.subr.mxu0 0.0
        %698 = vmatpush1.xpose.msra.mxu0 0.0
        %699 = vmatprep.subr.mxu0 0.0
        %700 = vmatpush1.xpose.msra.mxu0 0.0
        %701 = vmatprep.subr.mxu0 0.0
        %702 = vmatpush1.xpose.msra.mxu0 0.0
        %703 = vmatprep.subr.mxu0 0.0
        %704 = vmatpush1.xpose.msra.mxu0 0.0
        %705 = vmatprep.subr.mxu0 0.0
        %706 = vmatpush1.xpose.msra.mxu0 0.0
        %707 = vmatprep.subr.mxu0 0.0
        %708 = vmatpush1.xpose.msra.mxu0 0.0
        %709 = vmatprep.subr.mxu0 0.0
        %710 = vmatpush1.xpose.msra.mxu0 0.0
        %711 = vmatprep.subr.mxu0 0.0
        %712 = vmatpush1.xpose.msra.mxu0 0.0
        %713 = vmatprep.subr.mxu0 0.0
        %714 = vmatpush1.xpose.msra.mxu0 0.0
        %715 = vmatprep.subr.mxu0 0.0
        %716 = vmatpush1.xpose.msra.mxu0 0.0
        %717 = vmatprep.subr.mxu0 0.0
        %718 = vmatpush1.xpose.msra.mxu0 0.0
        %719 = vmatprep.subr.mxu0 0.0
        %720 = vmatpush1.xpose.msra.mxu0 0.0
        %721 = vmatprep.subr.mxu0 0.0
        %722 = vmatpush1.xpose.msra.mxu0 0.0
        %723 = vmatprep.subr.mxu0 0.0
        %724 = vmatpush1.xpose.msra.mxu0 0.0
        %725 = vmatprep.mubr.f32.mxu0 0.0
        %726 = vmatmul.mubr.f32.gmra.mrb[0].mxu0 %v651
        %v727 = vpop.f32.mrb[0].mxu0
        %v728 = vadd.f32 0.0, %v727
        %v729 = vpop.f32.mrb[0].mxu0
        %730 = vdwg.mxu0
        %vm731 = vcmp.gt.f32.partialorder %v400, 0.0
        %v732 = vsel %vm731, %v728, -1e+30
        %v733 = vsel %vm405, %v732, -inf
        %734 = vmax.xlane.f32.xlu0 %v733
        %v735 = vpop.xlane.xlu0 %734
        %v736 = vsub.f32 %v732, %v735
        %v737 = vmul.f32 %v736, 1.442695
        %v738 = vpow.pop %v737
        %743 = vrot.lane.b32.xlu0 %v634, 64
        %v744 = vpop.permute.xlu0 %743
        %745 = vrot.lane.b32.xlu0 %v635, 64
        %v746 = vpop.permute.xlu0 %745
        %747 = vrot.lane.b32.xlu0 %v636, 64
        %v748 = vpop.permute.xlu0 %747
        %749 = vrot.lane.b32.xlu0 %v637, 64
        %v750 = vpop.permute.xlu0 %749
        %v756 = vsel %vm405, %v738, 0
        %758 = vmatprep.subr.mxu0 0.0
        %759 = vmatpush1.msra.mxu0 %v744
        %760 = vmatprep.subr.mxu0 0.0
        %761 = vmatpush1.msra.mxu0 %v746
        %762 = vmatprep.subr.mxu0 0.0
        %763 = vmatpush1.msra.mxu0 %v748
        %764 = vmatprep.subr.mxu0 0.0
        %765 = vmatpush1.msra.mxu0 %v750
        %766 = vmatprep.subr.mxu0 0.0
        %767 = vmatpush1.msra.mxu0 0.0
        %768 = vmatprep.subr.mxu0 0.0
        %769 = vmatpush1.msra.mxu0 0.0
        %770 = vmatprep.subr.mxu0 0.0
        %771 = vmatpush1.msra.mxu0 0.0
        %772 = vmatprep.subr.mxu0 0.0
        %773 = vmatpush1.msra.mxu0 0.0
        %774 = vmatprep.subr.mxu0 0.0
        %775 = vmatpush1.msra.mxu0 0.0
        %776 = vmatprep.subr.mxu0 0.0
        %777 = vmatpush1.msra.mxu0 0.0
        %778 = vmatprep.subr.mxu0 0.0
        %779 = vmatpush1.msra.mxu0 0.0
        %780 = vmatprep.subr.mxu0 0.0
        %781 = vmatpush1.msra.mxu0 0.0
        %782 = vmatprep.subr.mxu0 0.0
        %783 = vmatpush1.msra.mxu0 0.0
        %784 = vmatprep.subr.mxu0 0.0
        %785 = vmatpush1.msra.mxu0 0.0
        %786 = vmatprep.subr.mxu0 0.0
        %787 = vmatpush1.msra.mxu0 0.0
        %788 = vmatprep.subr.mxu0 0.0
        %789 = vmatpush1.msra.mxu0 0.0
        %790 = vmatprep.subr.mxu0 0.0
        %791 = vmatpush1.msra.mxu0 0.0
        %792 = vmatprep.subr.mxu0 0.0
        %793 = vmatpush1.msra.mxu0 0.0
        %794 = vmatprep.subr.mxu0 0.0
        %795 = vmatpush1.msra.mxu0 0.0
        %796 = vmatprep.subr.mxu0 0.0
        %797 = vmatpush1.msra.mxu0 0.0
        %798 = vmatprep.subr.mxu0 0.0
        %799 = vmatpush1.msra.mxu0 0.0
        %800 = vmatprep.subr.mxu0 0.0
        %801 = vmatpush1.msra.mxu0 0.0
        %802 = vmatprep.subr.mxu0 0.0
        %803 = vmatpush1.msra.mxu0 0.0
        %804 = vmatprep.subr.mxu0 0.0
        %805 = vmatpush1.msra.mxu0 0.0
        %806 = vmatprep.subr.mxu0 0.0
        %807 = vmatpush1.msra.mxu0 0.0
        %808 = vmatprep.subr.mxu0 0.0
        %809 = vmatpush1.msra.mxu0 0.0
        %810 = vmatprep.subr.mxu0 0.0
        %811 = vmatpush1.msra.mxu0 0.0
        %812 = vmatprep.subr.mxu0 0.0
        %813 = vmatpush1.msra.mxu0 0.0
        %814 = vmatprep.subr.mxu0 0.0
        %815 = vmatpush1.msra.mxu0 0.0
        %816 = vmatprep.subr.mxu0 0.0
        %817 = vmatpush1.msra.mxu0 0.0
        %818 = vmatprep.subr.mxu0 0.0
        %819 = vmatpush1.msra.mxu0 0.0
        %820 = vmatprep.subr.mxu0 0.0
        %821 = vmatpush1.msra.mxu0 0.0
        %822 = vmatprep.mubr.f32.mxu0 0.0
        %823 = vmatmul.mubr.f32.gmra.mrb[0].mxu0 %v756
        %v824 = vpop.f32.mrb[0].mxu0
        %v825 = vadd.f32 0.0, %v824
        %v826 = vpop.f32.mrb[0].mxu0
        %827 = vdwg.mxu0
        %828 = vmatprep.subr.mxu0 0.0
        %829 = vmatpush1.msra.mxu0 %v396
        %830 = vmatprep.subr.mxu0 0.0
        %831 = vmatpush1.msra.mxu0 %v397
        %832 = vmatprep.subr.mxu0 0.0
        %833 = vmatpush1.msra.mxu0 %v398
        %834 = vmatprep.subr.mxu0 0.0
        %835 = vmatpush1.msra.mxu0 %v399
        %836 = vmatprep.subr.mxu0 0.0
        %837 = vmatpush1.msra.mxu0 0.0
        %838 = vmatprep.subr.mxu0 0.0
        %839 = vmatpush1.msra.mxu0 0.0
        %840 = vmatprep.subr.mxu0 0.0
        %841 = vmatpush1.msra.mxu0 0.0
        %842 = vmatprep.subr.mxu0 0.0
        %843 = vmatpush1.msra.mxu0 0.0
        %844 = vmatprep.subr.mxu0 0.0
        %845 = vmatpush1.msra.mxu0 0.0
        %846 = vmatprep.subr.mxu0 0.0
        %847 = vmatpush1.msra.mxu0 0.0
        %848 = vmatprep.subr.mxu0 0.0
        %849 = vmatpush1.msra.mxu0 0.0
        %850 = vmatprep.subr.mxu0 0.0
        %851 = vmatpush1.msra.mxu0 0.0
        %852 = vmatprep.subr.mxu0 0.0
        %853 = vmatpush1.msra.mxu0 0.0
        %854 = vmatprep.subr.mxu0 0.0
        %855 = vmatpush1.msra.mxu0 0.0
        %856 = vmatprep.subr.mxu0 0.0
        %857 = vmatpush1.msra.mxu0 0.0
        %858 = vmatprep.subr.mxu0 0.0
        %859 = vmatpush1.msra.mxu0 0.0
        %860 = vmatprep.subr.mxu0 0.0
        %861 = vmatpush1.msra.mxu0 0.0
        %862 = vmatprep.subr.mxu0 0.0
        %863 = vmatpush1.msra.mxu0 0.0
        %864 = vmatprep.subr.mxu0 0.0
        %865 = vmatpush1.msra.mxu0 0.0
        %866 = vmatprep.subr.mxu0 0.0
        %867 = vmatpush1.msra.mxu0 0.0
        %868 = vmatprep.subr.mxu0 0.0
        %869 = vmatpush1.msra.mxu0 0.0
        %870 = vmatprep.subr.mxu0 0.0
        %871 = vmatpush1.msra.mxu0 0.0
        %872 = vmatprep.subr.mxu0 0.0
        %873 = vmatpush1.msra.mxu0 0.0
        %874 = vmatprep.subr.mxu0 0.0
        %875 = vmatpush1.msra.mxu0 0.0
        %876 = vmatprep.subr.mxu0 0.0
        %877 = vmatpush1.msra.mxu0 0.0
        %878 = vmatprep.subr.mxu0 0.0
        %879 = vmatpush1.msra.mxu0 0.0
        %880 = vmatprep.subr.mxu0 0.0
        %881 = vmatpush1.msra.mxu0 0.0
        %882 = vmatprep.subr.mxu0 0.0
        %883 = vmatpush1.msra.mxu0 0.0
        %884 = vmatprep.subr.mxu0 0.0
        %885 = vmatpush1.msra.mxu0 0.0
        %886 = vmatprep.subr.mxu0 0.0
        %887 = vmatpush1.msra.mxu0 0.0
        %888 = vmatprep.subr.mxu0 0.0
        %889 = vmatpush1.msra.mxu0 0.0
        %890 = vmatprep.subr.mxu0 0.0
        %891 = vmatpush1.msra.mxu0 0.0
        %892 = vmatprep.mubr.f32.mxu0 0.0
        %893 = vmatmul.mubr.f32.gmra.mrb[0].mxu0 %v756
        %v894 = vpop.f32.mrb[0].mxu0
        %v895 = vadd.f32 0.0, %v894
        %v896 = vpop.f32.mrb[0].mxu0
        %897 = vdwg.mxu0
        %v898 = vrcp.pop %v895
        %v899 = vmul.f32 %v825, %v898
        %v900 = vpack.c.bf16 %v899, %v899
        %v901 = vld [vmem:[%s338] sm:$0xf]
        %v902 = vld [vmem:[%s338 + $0x4] sm:$0xf]
        %v903 = vld [vmem:[%s338 + $0x8] sm:$0xf]
        %v904 = vld [vmem:[%s338 + $0xc] sm:$0xf]
        %v909 = vunpack.c.l.b16 %v901
        %v910 = vunpack.c.l.b16 %v902
        %v911 = vunpack.c.l.b16 %v903
        %v912 = vunpack.c.l.b16 %v904
        %v913 = vpack.c.b16 %v910, %v909
        %v914 = vpack.c.b16 %v912, %v911
        %v918 = vsel %vm405, %v900, 0
        %920 = vmatprep.subr.bf16.mxu0 0
        %921 = vmatpush1.bf16.msra.mxu0 %v913
        %922 = vmatprep.subr.bf16.mxu0 0
        %923 = vmatpush1.bf16.msra.mxu0 %v914
        %924 = vmatprep.subr.bf16.mxu0 0
        %925 = vmatpush1.bf16.msra.mxu0 0
        %926 = vmatprep.subr.bf16.mxu0 0
        %927 = vmatpush1.bf16.msra.mxu0 0
        %928 = vmatprep.subr.bf16.mxu0 0
        %929 = vmatpush1.bf16.msra.mxu0 0
        %930 = vmatprep.subr.bf16.mxu0 0
        %931 = vmatpush1.bf16.msra.mxu0 0
        %932 = vmatprep.subr.bf16.mxu0 0
        %933 = vmatpush1.bf16.msra.mxu0 0
        %934 = vmatprep.subr.bf16.mxu0 0
        %935 = vmatpush1.bf16.msra.mxu0 0
        %936 = vmatprep.subr.bf16.mxu0 0
        %937 = vmatpush1.bf16.msra.mxu0 0
        %938 = vmatprep.subr.bf16.mxu0 0
        %939 = vmatpush1.bf16.msra.mxu0 0
        %940 = vmatprep.subr.bf16.mxu0 0
        %941 = vmatpush1.bf16.msra.mxu0 0
        %942 = vmatprep.subr.bf16.mxu0 0
        %943 = vmatpush1.bf16.msra.mxu0 0
        %944 = vmatprep.subr.bf16.mxu0 0
        %945 = vmatpush1.bf16.msra.mxu0 0
        %946 = vmatprep.subr.bf16.mxu0 0
        %947 = vmatpush1.bf16.msra.mxu0 0
        %948 = vmatprep.subr.bf16.mxu0 0
        %949 = vmatpush1.bf16.msra.mxu0 0
        %950 = vmatprep.subr.bf16.mxu0 0
        %951 = vmatpush1.bf16.msra.mxu0 0
        %952 = vmatprep.mubr.bf16.mxu0 0
        %953 = vmatmul.mubr.bf16.gmra.mrb[0].mxu0 %v918
        %v954 = vpop.f32.mrb[0].mxu0
        %v955 = vadd.f32 0.0, %v954
        %v956 = vpop.f32.mrb[0].mxu0
        %v957 = vpop.f32.mrb[0].mxu0
        %v958 = vpop.f32.mrb[0].mxu0
        %959 = vdwg.mxu0
        %v960 = vadd.f32 %v403, %v955
        %v961 = vmul.f32 %v960, %v960
        %v962 = vsel %vm405, %v961, 0.0
        %963 = vadd.xlane.f32.xlu0 %v962
        %v964 = vpop.xlane.xlu0 %963
        %v965 = vmul.f32 %v964, %v409
        %v966 = vadd.f32 %v965, 1e-06
        %v967 = vrsqrt.pop %v966
        %v968 = vmul.f32 %v960, %v967
        %969 = vrot.lane.b32.xlu0 %v418, 96
        %v970 = vpop.permute.xlu0 %969
        %v972 = vmul.f32 %v968, %v970
        %v973 = vpack.c.bf16 %v972, %v972
        %v974 = vld [vmem:[%s343] sm:$0xf]
        %v975 = vld [vmem:[%s343 + $0x4] sm:$0xf]
        %v976 = vld [vmem:[%s343 + $0x8] sm:$0xf]
        %v977 = vld [vmem:[%s343 + $0xc] sm:$0xf]
        %v982 = vunpack.c.l.b16 %v974
        %v983 = vunpack.c.l.b16 %v975
        %v984 = vunpack.c.l.b16 %v976
        %v985 = vunpack.c.l.b16 %v977
        %v986 = vpack.c.b16 %v983, %v982
        %v987 = vpack.c.b16 %v985, %v984
        %v991 = vsel %vm405, %v973, 0
        %993 = vmatprep.subr.bf16.mxu0 0
        %994 = vmatpush1.bf16.msra.mxu0 %v986
        %995 = vmatprep.subr.bf16.mxu0 0
        %996 = vmatpush1.bf16.msra.mxu0 %v987
        %997 = vmatprep.subr.bf16.mxu0 0
        %998 = vmatpush1.bf16.msra.mxu0 0
        %999 = vmatprep.subr.bf16.mxu0 0
        %1000 = vmatpush1.bf16.msra.mxu0 0
        %1001 = vmatprep.subr.bf16.mxu0 0
        %1002 = vmatpush1.bf16.msra.mxu0 0
        %1003 = vmatprep.subr.bf16.mxu0 0
        %1004 = vmatpush1.bf16.msra.mxu0 0
        %1005 = vmatprep.subr.bf16.mxu0 0
        %1006 = vmatpush1.bf16.msra.mxu0 0
        %1007 = vmatprep.subr.bf16.mxu0 0
        %1008 = vmatpush1.bf16.msra.mxu0 0
        %1009 = vmatprep.subr.bf16.mxu0 0
        %1010 = vmatpush1.bf16.msra.mxu0 0
        %1011 = vmatprep.subr.bf16.mxu0 0
        %1012 = vmatpush1.bf16.msra.mxu0 0
        %1013 = vmatprep.subr.bf16.mxu0 0
        %1014 = vmatpush1.bf16.msra.mxu0 0
        %1015 = vmatprep.subr.bf16.mxu0 0
        %1016 = vmatpush1.bf16.msra.mxu0 0
        %1017 = vmatprep.subr.bf16.mxu0 0
        %1018 = vmatpush1.bf16.msra.mxu0 0
        %1019 = vmatprep.subr.bf16.mxu0 0
        %1020 = vmatpush1.bf16.msra.mxu0 0
        %1021 = vmatprep.subr.bf16.mxu0 0
        %1022 = vmatpush1.bf16.msra.mxu0 0
        %1023 = vmatprep.subr.bf16.mxu0 0
        %1024 = vmatpush1.bf16.msra.mxu0 0
        %1025 = vmatprep.mubr.bf16.mxu0 0
        %1026 = vmatmul.mubr.bf16.gmra.mrb[0].mxu0 %v991
        %v1027 = vpop.f32.mrb[0].mxu0
        %v1028 = vadd.f32 0.0, %v1027
        %v1029 = vpop.f32.mrb[0].mxu0
        %v1030 = vpop.f32.mrb[0].mxu0
        %v1031 = vpop.f32.mrb[0].mxu0
        %1032 = vdwg.mxu0
        %v1033 = vxor.u32 %v1028, 2147483648
        %v1034 = vmul.f32 %v1033, 1.442695
        %v1035 = vpow.pop %v1034
        %v1036 = vadd.f32 %v1035, 1.0
        %v1037 = vrcp.pop %v1036
        %v1038 = vmul.f32 1.0, %v1037
        %v1039 = vmul.f32 %v1028, %v1038
        %1041 = vrot.lane.b32.xlu0 %v1028, 64
        %v1042 = vpop.permute.xlu0 %1041
        %v1044 = vmul.f32 %v1039, %v1042
        %v1045 = vpack.c.bf16 %v1044, %v1044
        %v1046 = vld [vmem:[%s348] sm:$0xf]
        %v1047 = vld [vmem:[%s348 + $0x4] sm:$0xf]
        %v1048 = vld [vmem:[%s348 + $0x8] sm:$0xf]
        %v1049 = vld [vmem:[%s348 + $0xc] sm:$0xf]
        %v1050 = vld [vmem:[%s348 + $0x10] sm:$0xf]
        %v1051 = vld [vmem:[%s348 + $0x14] sm:$0xf]
        %v1052 = vld [vmem:[%s348 + $0x18] sm:$0xf]
        %v1053 = vld [vmem:[%s348 + $0x1c] sm:$0xf]
        %v1062 = vunpack.c.l.b16 %v1046
        %v1063 = vunpack.c.l.b16 %v1047
        %v1064 = vunpack.c.l.b16 %v1048
        %v1065 = vunpack.c.l.b16 %v1049
        %v1066 = vunpack.c.l.b16 %v1050
        %v1067 = vunpack.c.l.b16 %v1051
        %v1068 = vunpack.c.l.b16 %v1052
        %v1069 = vunpack.c.l.b16 %v1053
        %v1070 = vpack.c.b16 %v1063, %v1062
        %v1071 = vpack.c.b16 %v1065, %v1064
        %v1072 = vpack.c.b16 %v1067, %v1066
        %v1073 = vpack.c.b16 %v1069, %v1068
        %v1079 = vsel %vm451, %v1045, 0
        %1081 = vmatprep.subr.bf16.mxu0 0
        %1082 = vmatpush1.bf16.msra.mxu0 %v1070
        %1083 = vmatprep.subr.bf16.mxu0 0
        %1084 = vmatpush1.bf16.msra.mxu0 %v1071
        %1085 = vmatprep.subr.bf16.mxu0 0
        %1086 = vmatpush1.bf16.msra.mxu0 %v1072
        %1087 = vmatprep.subr.bf16.mxu0 0
        %1088 = vmatpush1.bf16.msra.mxu0 %v1073
        %1089 = vmatprep.subr.bf16.mxu0 0
        %1090 = vmatpush1.bf16.msra.mxu0 0
        %1091 = vmatprep.subr.bf16.mxu0 0
        %1092 = vmatpush1.bf16.msra.mxu0 0
        %1093 = vmatprep.subr.bf16.mxu0 0
        %1094 = vmatpush1.bf16.msra.mxu0 0
        %1095 = vmatprep.subr.bf16.mxu0 0
        %1096 = vmatpush1.bf16.msra.mxu0 0
        %1097 = vmatprep.subr.bf16.mxu0 0
        %1098 = vmatpush1.bf16.msra.mxu0 0
        %1099 = vmatprep.subr.bf16.mxu0 0
        %1100 = vmatpush1.bf16.msra.mxu0 0
        %1101 = vmatprep.subr.bf16.mxu0 0
        %1102 = vmatpush1.bf16.msra.mxu0 0
        %1103 = vmatprep.subr.bf16.mxu0 0
        %1104 = vmatpush1.bf16.msra.mxu0 0
        %1105 = vmatprep.subr.bf16.mxu0 0
        %1106 = vmatpush1.bf16.msra.mxu0 0
        %1107 = vmatprep.subr.bf16.mxu0 0
        %1108 = vmatpush1.bf16.msra.mxu0 0
        %1109 = vmatprep.subr.bf16.mxu0 0
        %1110 = vmatpush1.bf16.msra.mxu0 0
        %1111 = vmatprep.subr.bf16.mxu0 0
        %1112 = vmatpush1.bf16.msra.mxu0 0
        %1113 = vmatprep.mubr.bf16.mxu0 0
        %1114 = vmatmul.mubr.bf16.gmra.mrb[0].mxu0 %v1079
        %v1115 = vpop.f32.mrb[0].mxu0
        %v1116 = vadd.f32 0.0, %v1115
        %v1117 = vpop.f32.mrb[0].mxu0
        %v1118 = vpop.f32.mrb[0].mxu0
        %v1119 = vpop.f32.mrb[0].mxu0
        %1120 = vdwg.mxu0
        %v1121 = vadd.f32 %v960, %v1116
        %p1122 = scmp.eq.s32.totalorder %s26, 1
        %p1123 = scmp.ne.s32.totalorder %s26, 1
        // Predicated region
        $region53: #{qwen_forward.1} parent=47 // pred_check
          %p1124 = pneg %p1123
        $region54: #{qwen_forward.1} parent=47 // pred_check_branch
          %1126 = sbr.rel (%p1124) target = $region56
        $region55: #{qwen_forward.1} parent=47 // pred_region
          %1127 = vst.msk [vmem:[#allocation4] sm:$0xff] %vm405, %v1121
        $region56: #{qwen_forward.1} parent=47 // pred_fallthru
          _
        // Predicated region
        $region57: #{qwen_forward.1} parent=47 // pred_check
          %p1128 = pneg %p1122
        $region58: #{qwen_forward.1} parent=47 // pred_check_branch
          %1130 = sbr.rel (%p1128) target = $region60
        $region59: #{qwen_forward.1} parent=47 // pred_region
          %v1131 = vmul.f32 %v1121, %v1121
          %v1132 = vsel %vm405, %v1131, 0.0
          %1133 = vadd.xlane.f32.xlu0 %v1132
          %v1134 = vpop.xlane.xlu0 %1133
          %v1135 = vmul.f32 %v1134, %v409
          %v1136 = vadd.f32 %v1135, 1e-06
          %v1137 = vrsqrt.pop %v1136
          %v1138 = vmul.f32 %v1121, %v1137
          %v1139 = vlaneseq
          %v1140 = vshrl.u32 %v1139, 7
          %v1141 = vsub.s32 0, %v1140
          %v1142 = vrot.slane %v389, %v1141
          %v1143 = vmul.f32 %v1138, %v1142
          %1144 = vst.msk [vmem:[#allocation4] sm:$0xff] %vm405, %v1143
        $region60: #{qwen_forward.1} parent=47 // pred_fallthru
          _
        // Predicated region
        $region61: #{qwen_forward.1} parent=47 // pred_check
          %p1145 = pneg %p211
        $region62: #{qwen_forward.1} parent=47 // pred_check_branch
          %1147 = sbr.rel (%p1145) target = $region64
        $region63: #{qwen_forward.1} parent=47 // pred_region
          %s1149 = ssub.s32 128, 128
          %1150 = vsyncadd [#allocation5], %s1149
          %s1152 = sshll.u32 [#allocation4], 4
          %s1153 = int_to_ptr.vmem [resolvable:$true] %s1152
          %1155 = dma.vmem_to_hbm [thread:$0]  %s1153, 128, %s8, [#allocation5]
        $region64: #{qwen_forward.1} parent=47 // pred_fallthru
          _
        // Predicated region
        $region65: #{qwen_forward.1} parent=47 // pred_check
          %p1156 = pneg %p211
        $region66: #{qwen_forward.1} parent=47 // pred_check_branch
          %1158 = sbr.rel (%p1156) target = $region68
        $region67: #{qwen_forward.1} parent=47 // pred_region
          %1159 = dma.done [#allocation5], 128
        $region68: #{qwen_forward.1} parent=47 // pred_fallthru
          _
      $region48: #{qwen_forward.1} parent=5 // pred_fallthru
        _
      %p1160 = scmp.le.s32.totalorder 2, %s21
      // Predicated region
      $region69: #{qwen_forward.1} parent=5 // pred_check
        %p1161 = pneg %p1160
      $region70: #{qwen_forward.1} parent=5 // pred_check_branch
        %1163 = sbr.rel (%p1161) target = $region72
      $region71: #{qwen_forward.1} parent=5 // pred_region
        %s1164 = ssub.s32 %s21, 2
      $region72: #{qwen_forward.1} parent=5 // pred_fallthru
        _
    $region6: #{qwen_forward.1} parent=1 // loop_footer
      %s25 = sadd.s32 1, %s21
    $region7: #{qwen_forward.1} parent=1 // loop_footer_branch
      %20 = sbr.rel target = $region3
    $region8: #{qwen_forward.1} parent=1 // loop_exit
      _
    %1165 = vsyncpa [#allocation5], 1
    %s1166 = scalar_lea.sflag [#allocation5], 1
    %1167 = vsyncpa %s1166, 1

</llo_original>
